<compile_context>
chip_gen: v5e
topology: v5e:2x2
jax: 0.10.0
libtpu: 0.0.40
codegen_flags: <defaults>
</compile_context>

<pallas_src>
import functools

import jax
import jax.numpy as jnp
from jax.experimental import pallas as pl
from jax.experimental.pallas import tpu as pltpu


# ----------------------------------------------------------------------------
# Fused kernel: all LSTM layers + final Linear, one grid step per batch block.
# Packed gate order along the 4H lane axis: [i, f, o, g].
# ----------------------------------------------------------------------------
def _fused_lstm_kernel(num_layers, hidden_size, seq_len, x_ref, *refs):
    H, T, L = hidden_size, seq_len, num_layers
    # Input refs after x: per layer (w_ih (D_in,4H) bf16, w_hh (H,4H) bf16,
    # b (1,4H) f32), then w_lin (H,O) bf16, b_lin (1,O) f32, then out (Bc,O).
    w_ih_refs = [refs[3 * l + 0] for l in range(L)]
    w_hh_refs = [refs[3 * l + 1] for l in range(L)]
    b_refs = [refs[3 * l + 2] for l in range(L)]
    w_lin_ref, b_lin_ref, out_ref = refs[3 * L:]

    TBc, _ = x_ref.shape
    Bc = TBc // T

    # Layer-0 input projection: ONE lane-dense (T*Bc, D) x (D, 4H) MXU matmul,
    # bias folded in once. Hoisted off the recurrent critical path.
    gx = jnp.dot(x_ref[...].astype(jnp.bfloat16), w_ih_refs[0][...],
                 preferred_element_type=jnp.float32) + b_refs[0][...]

    h = None
    hs = []
    for l in range(L):
        is_last = l == L - 1

        if l > 0:
            # Inner-layer input projection, also hoisted: one matmul per layer
            # over the previous layer's whole hidden sequence (live values,
            # no VMEM scratch round trip).
            x_prev = jnp.concatenate(hs, axis=0).astype(jnp.bfloat16)  # (T*Bc, H)
            gx = jnp.dot(x_prev, w_ih_refs[l][...],
                         preferred_element_type=jnp.float32) + b_refs[l][...]
            # TODO(synk): inter-layer dropout (training mode) would go here.

        # Load the recurrent weight once per layer (not per timestep).
        w_hh = w_hh_refs[l][...]                           # (H, 4H) bf16

        h = jnp.zeros((Bc, H), jnp.float32)
        c = jnp.zeros((Bc, H), jnp.float32)
        hs = []
        # Serial recurrence; T is small and static -> full unroll so the LLO
        # scheduler can overlap gate math with the next step's matmul.
        for t in range(T):
            # Single 128-lane-wide recurrent matmul per step (gates packed).
            a = gx[t * Bc:(t + 1) * Bc, :] + jnp.dot(
                h.astype(jnp.bfloat16), w_hh, preferred_element_type=jnp.float32)
            sig = jax.nn.sigmoid(a[:, :3 * H])             # [i, f, o] in one EUP pass
            g_g = jnp.tanh(a[:, 3 * H:])
            i_g = sig[:, :H]
            f_g = sig[:, H:2 * H]
            o_g = sig[:, 2 * H:3 * H]
            c = f_g * c + i_g * g_g
            h = o_g * jnp.tanh(c)
            if not is_last:
                hs.append(h)

    # Fused final Linear epilogue on the last timestep of the last layer
    # (== self.linear(lstm_out[:, -1]) in the PyTorch module).
    out_ref[...] = (jnp.dot(h.astype(jnp.bfloat16), w_lin_ref[...],
                            preferred_element_type=jnp.float32)
                    + b_lin_ref[...]).astype(out_ref.dtype)


# ----------------------------------------------------------------------------
# Parameters (mirror nn.LSTM / nn.Linear shapes; stored gate-packed, bf16)
# ----------------------------------------------------------------------------
def init_params(key, input_size, hidden_size, num_layers, output_size):
    params = {"lstm": [], "linear": {}}
    H = hidden_size
    bound = 1.0 / (hidden_size ** 0.5)
    order = (0, 1, 3, 2)   # PyTorch gate order [i, f, g, o] -> packed [i, f, o, g]
    for layer in range(num_layers):
        d_in = input_size if layer == 0 else H
        key, k1, k2, k3, k4 = jax.random.split(key, 5)
        w_ih = jax.random.uniform(k1, (4 * H, d_in), jnp.float32, -bound, bound)
        w_hh = jax.random.uniform(k2, (4 * H, H), jnp.float32, -bound, bound)
        b_ih = jax.random.uniform(k3, (4 * H,), jnp.float32, -bound, bound)
        b_hh = jax.random.uniform(k4, (4 * H,), jnp.float32, -bound, bound)
        w_ih_g = w_ih.reshape(4, H, d_in)
        w_hh_g = w_hh.reshape(4, H, H)
        b_g = (b_ih + b_hh).reshape(4, H)
        # Pack gates along the output/lane axis -> (d_in, 4H) / (H, 4H).
        w_ih_p = jnp.concatenate([w_ih_g[k].T for k in order], axis=1).astype(jnp.bfloat16)
        w_hh_p = jnp.concatenate([w_hh_g[k].T for k in order], axis=1).astype(jnp.bfloat16)
        b_p = jnp.concatenate([b_g[k] for k in order], axis=0).reshape(1, 4 * H).astype(jnp.float32)
        params["lstm"].append({"w_ih": w_ih_p, "w_hh": w_hh_p, "b": b_p})
    key, k1, k2 = jax.random.split(key, 3)
    w = jax.random.uniform(k1, (output_size, hidden_size), jnp.float32, -bound, bound)
    b = jax.random.uniform(k2, (output_size,), jnp.float32, -bound, bound)
    params["linear"] = {"w_t": w.T.astype(jnp.bfloat16),
                        "b": b.reshape(1, -1).astype(jnp.float32)}
    return params


def _num_tensorcores():
    """2 TensorCores per chip only on v7x-class devices; v5e/v6e have 1."""
    try:
        kind = jax.devices()[0].device_kind.lower()
    except Exception:
        return 1
    return 2 if "v7" in kind else 1


# ----------------------------------------------------------------------------
# Wrapper
# ----------------------------------------------------------------------------
@jax.jit
def lstm_model_forward(params, x_btd):
    """x_btd: (B, T, input_size), batch-first as in the PyTorch module."""
    B, T, D = x_btd.shape
    L = len(params["lstm"])
    H = params["lstm"][0]["w_hh"].shape[0]
    O = params["linear"]["w_t"].shape[-1]

    # Split the batch over a 'parallel' grid axis only when 2 TCs exist (v7x)
    # and the per-block batch stays 8-sublane aligned; otherwise a grid of 2
    # just serializes the latency-bound recurrence on v5e/v6e.
    NB = 2 if (_num_tensorcores() >= 2 and B % 16 == 0) else 1
    Bc = B // NB

    # Lay the input out t-major *within* each batch block so the kernel's
    # per-timestep slice gx[t*Bc:(t+1)*Bc] is a contiguous sublane slab and the
    # layer-0 projection is a single (T*Bc, D) matmul with no in-kernel reshape.
    x_flat = (x_btd.reshape(NB, Bc, T, D)
                   .transpose(0, 2, 1, 3)
                   .reshape(NB * T * Bc, D))

    args = [x_flat]
    in_specs = [pl.BlockSpec((T * Bc, D), lambda i: (i, 0))]
    # Grid-invariant weights: constant index_map, full-shape blocks.
    for lp in params["lstm"]:
        args += [lp["w_ih"], lp["w_hh"], lp["b"]]
        in_specs += [
            pl.BlockSpec(lp["w_ih"].shape, lambda i: (0, 0)),
            pl.BlockSpec(lp["w_hh"].shape, lambda i: (0, 0)),
            pl.BlockSpec(lp["b"].shape, lambda i: (0, 0)),
        ]
    args += [params["linear"]["w_t"], params["linear"]["b"]]
    in_specs += [
        pl.BlockSpec(params["linear"]["w_t"].shape, lambda i: (0, 0)),
        pl.BlockSpec(params["linear"]["b"].shape, lambda i: (0, 0)),
    ]

    return pl.pallas_call(
        functools.partial(_fused_lstm_kernel, L, H, T),
        out_shape=jax.ShapeDtypeStruct((B, O), jnp.float32),
        grid_spec=pltpu.PrefetchScalarGridSpec(
            num_scalar_prefetch=0,
            grid=(NB,),
            in_specs=in_specs,
            out_specs=pl.BlockSpec((Bc, O), lambda i: (i, 0)),
        ),
        compiler_params=pltpu.CompilerParams(
            dimension_semantics=("parallel",)),
    )(*args)


# ----------------------------------------------------------------------------
# Pure-JAX reference (same packed bf16 weights / bf16 matmul inputs)
# ----------------------------------------------------------------------------
def reference_forward(params, x_btd):
    B, T, _ = x_btd.shape
    H = params["lstm"][0]["w_hh"].shape[0]
    x = x_btd
    for lp in params["lstm"]:
        h = jnp.zeros((B, H), jnp.float32)
        c = jnp.zeros((B, H), jnp.float32)
        outs = []
        for t in range(T):
            xt = x[:, t].astype(jnp.bfloat16)
            a = (jnp.dot(xt, lp["w_ih"], preferred_element_type=jnp.float32)
                 + jnp.dot(h.astype(jnp.bfloat16), lp["w_hh"],
                           preferred_element_type=jnp.float32)
                 + lp["b"])
            i_g = jax.nn.sigmoid(a[:, 0:H])
            f_g = jax.nn.sigmoid(a[:, H:2 * H])
            o_g = jax.nn.sigmoid(a[:, 2 * H:3 * H])
            g_g = jnp.tanh(a[:, 3 * H:4 * H])
            c = f_g * c + i_g * g_g
            h = o_g * jnp.tanh(c)
            outs.append(h)
        x = jnp.stack(outs, axis=1)
    return (jnp.dot(x[:, -1].astype(jnp.bfloat16), params["linear"]["w_t"],
                    preferred_element_type=jnp.float32)
            + params["linear"]["b"])


if __name__ == "__main__":
    # Small shapes consistent with LSTMModel(input_size, hidden, layers, output, dropout)
    B, T = 16, 8
    input_size, hidden_size, num_layers, output_size = 16, 32, 2, 4
    dropout_prob = 0.1  # inactive in inference mode

    key = jax.random.PRNGKey(0)
    pkey, xkey = jax.random.split(key)
    params = init_params(pkey, input_size, hidden_size, num_layers, output_size)
    x = jax.random.normal(xkey, (B, T, input_size), jnp.float32)

    out = lstm_model_forward(params, x)
    out = jax.block_until_ready(out)

    ref = reference_forward(params, x)
    assert out.shape == (B, output_size)
    assert jnp.allclose(out, ref, atol=1e-3, rtol=1e-3), float(
        jnp.max(jnp.abs(out - ref)))

    print("KERNEL_OK")
</pallas_src>

<mosaic_0001>
module attributes {stable_mosaic.version = 11 : i64} {
  func.func @_fused_lstm_kernel(%arg0: i32, %arg1: memref<128x16xf32, #tpu.memory_space<vmem>>, %arg2: memref<16x128xbf16, #tpu.memory_space<vmem>>, %arg3: memref<32x128xbf16, #tpu.memory_space<vmem>>, %arg4: memref<1x128xf32, #tpu.memory_space<vmem>>, %arg5: memref<32x128xbf16, #tpu.memory_space<vmem>>, %arg6: memref<32x128xbf16, #tpu.memory_space<vmem>>, %arg7: memref<1x128xf32, #tpu.memory_space<vmem>>, %arg8: memref<32x4xbf16, #tpu.memory_space<vmem>>, %arg9: memref<1x4xf32, #tpu.memory_space<vmem>>, %arg10: memref<16x4xf32, #tpu.memory_space<vmem>>) attributes {dimension_semantics = [#tpu.dimension_semantics<parallel>], iteration_bounds = array<i64: 1>, scalar_prefetch = 0 : i64, scratch_operands = 0 : i64, tpu.core_type = #tpu.core_type<tc>, window_params = [{transform_indices = @transform_0, window_bounds = array<i64: 128, 16>}, {pipeline_mode = #tpu.pipeline_mode<synchronous>, transform_indices = @transform_1, window_bounds = array<i64: 16, 128>}, {pipeline_mode = #tpu.pipeline_mode<synchronous>, transform_indices = @transform_2, window_bounds = array<i64: 32, 128>}, {pipeline_mode = #tpu.pipeline_mode<synchronous>, transform_indices = @transform_3, window_bounds = array<i64: 1, 128>}, {pipeline_mode = #tpu.pipeline_mode<synchronous>, transform_indices = @transform_4, window_bounds = array<i64: 32, 128>}, {pipeline_mode = #tpu.pipeline_mode<synchronous>, transform_indices = @transform_5, window_bounds = array<i64: 32, 128>}, {pipeline_mode = #tpu.pipeline_mode<synchronous>, transform_indices = @transform_6, window_bounds = array<i64: 1, 128>}, {pipeline_mode = #tpu.pipeline_mode<synchronous>, transform_indices = @transform_7, window_bounds = array<i64: 32, 4>}, {pipeline_mode = #tpu.pipeline_mode<synchronous>, transform_indices = @transform_8, window_bounds = array<i64: 1, 4>}, {transform_indices = @transform_9, window_bounds = array<i64: 16, 4>}]} {
    %c0 = arith.constant 0 : index
    %c0_0 = arith.constant 0 : index
    %0 = vector.load %arg1[%c0, %c0_0] : memref<128x16xf32, #tpu.memory_space<vmem>>, vector<128x16xf32>
    %1 = arith.truncf %0 : vector<128x16xf32> to vector<128x16xbf16>
    %c0_1 = arith.constant 0 : index
    %c0_2 = arith.constant 0 : index
    %2 = vector.load %arg2[%c0_1, %c0_2] : memref<16x128xbf16, #tpu.memory_space<vmem>>, vector<16x128xbf16>
    %cst = arith.constant dense<0.000000e+00> : vector<128x128xf32>
    %3 = tpu.matmul %1, %2, %cst {dimension_numbers = #tpu.dot_dimension_numbers<[1], [0], [0], [1], [0, 0, 1, 1], [], []>} : vector<128x16xbf16>, vector<16x128xbf16>, vector<128x128xf32> -> vector<128x128xf32>
    %c0_3 = arith.constant 0 : index
    %c0_4 = arith.constant 0 : index
    %4 = vector.load %arg4[%c0_3, %c0_4] : memref<1x128xf32, #tpu.memory_space<vmem>>, vector<1x128xf32>
    %5 = vector.broadcast %4 : vector<1x128xf32> to vector<128x128xf32>
    %6 = arith.addf %3, %5 : vector<128x128xf32>
    %c0_5 = arith.constant 0 : index
    %c0_6 = arith.constant 0 : index
    %7 = vector.load %arg3[%c0_5, %c0_6] : memref<32x128xbf16, #tpu.memory_space<vmem>>, vector<32x128xbf16>
    %cst_7 = arith.constant 0.000000e+00 : f32
    %8 = vector.broadcast %cst_7 : f32 to vector<16x32xf32>
    %cst_8 = arith.constant 0.000000e+00 : f32
    %9 = vector.broadcast %cst_8 : f32 to vector<16x32xf32>
    %10 = vector.extract_strided_slice %6 {offsets = [0, 0], sizes = [16, 128], strides = [1, 1]} : vector<128x128xf32> to vector<16x128xf32>
    %11 = arith.truncf %8 : vector<16x32xf32> to vector<16x32xbf16>
    %cst_9 = arith.constant dense<0.000000e+00> : vector<16x128xf32>
    %12 = tpu.matmul %11, %7, %cst_9 {dimension_numbers = #tpu.dot_dimension_numbers<[1], [0], [0], [1], [0, 0, 1, 1], [], []>} : vector<16x32xbf16>, vector<32x128xbf16>, vector<16x128xf32> -> vector<16x128xf32>
    %13 = arith.addf %10, %12 : vector<16x128xf32>
    %14 = vector.extract_strided_slice %13 {offsets = [0, 0], sizes = [16, 96], strides = [1, 1]} : vector<16x128xf32> to vector<16x96xf32>
    %15 = arith.negf %14 : vector<16x96xf32>
    %16 = math.exp %15 : vector<16x96xf32>
    %cst_10 = arith.constant 1.000000e+00 : f32
    %17 = vector.broadcast %cst_10 : f32 to vector<16x96xf32>
    %18 = arith.addf %17, %16 : vector<16x96xf32>
    %19 = arith.divf %17, %18 : vector<16x96xf32>
    %20 = vector.extract_strided_slice %13 {offsets = [0, 96], sizes = [16, 32], strides = [1, 1]} : vector<16x128xf32> to vector<16x32xf32>
    %21 = math.tanh %20 : vector<16x32xf32>
    %22 = vector.extract_strided_slice %19 {offsets = [0, 0], sizes = [16, 32], strides = [1, 1]} : vector<16x96xf32> to vector<16x32xf32>
    %23 = vector.extract_strided_slice %19 {offsets = [0, 32], sizes = [16, 32], strides = [1, 1]} : vector<16x96xf32> to vector<16x32xf32>
    %24 = vector.extract_strided_slice %19 {offsets = [0, 64], sizes = [16, 32], strides = [1, 1]} : vector<16x96xf32> to vector<16x32xf32>
    %25 = arith.mulf %23, %9 : vector<16x32xf32>
    %26 = arith.mulf %22, %21 : vector<16x32xf32>
    %27 = arith.addf %25, %26 : vector<16x32xf32>
    %28 = math.tanh %27 : vector<16x32xf32>
    %29 = arith.mulf %24, %28 : vector<16x32xf32>
    %30 = vector.extract_strided_slice %6 {offsets = [16, 0], sizes = [16, 128], strides = [1, 1]} : vector<128x128xf32> to vector<16x128xf32>
    %31 = arith.truncf %29 : vector<16x32xf32> to vector<16x32xbf16>
    %cst_11 = arith.constant dense<0.000000e+00> : vector<16x128xf32>
    %32 = tpu.matmul %31, %7, %cst_11 {dimension_numbers = #tpu.dot_dimension_numbers<[1], [0], [0], [1], [0, 0, 1, 1], [], []>} : vector<16x32xbf16>, vector<32x128xbf16>, vector<16x128xf32> -> vector<16x128xf32>
    %33 = arith.addf %30, %32 : vector<16x128xf32>
    %34 = vector.extract_strided_slice %33 {offsets = [0, 0], sizes = [16, 96], strides = [1, 1]} : vector<16x128xf32> to vector<16x96xf32>
    %35 = arith.negf %34 : vector<16x96xf32>
    %36 = math.exp %35 : vector<16x96xf32>
    %cst_12 = arith.constant 1.000000e+00 : f32
    %37 = vector.broadcast %cst_12 : f32 to vector<16x96xf32>
    %38 = arith.addf %37, %36 : vector<16x96xf32>
    %39 = arith.divf %37, %38 : vector<16x96xf32>
    %40 = vector.extract_strided_slice %33 {offsets = [0, 96], sizes = [16, 32], strides = [1, 1]} : vector<16x128xf32> to vector<16x32xf32>
    %41 = math.tanh %40 : vector<16x32xf32>
    %42 = vector.extract_strided_slice %39 {offsets = [0, 0], sizes = [16, 32], strides = [1, 1]} : vector<16x96xf32> to vector<16x32xf32>
    %43 = vector.extract_strided_slice %39 {offsets = [0, 32], sizes = [16, 32], strides = [1, 1]} : vector<16x96xf32> to vector<16x32xf32>
    %44 = vector.extract_strided_slice %39 {offsets = [0, 64], sizes = [16, 32], strides = [1, 1]} : vector<16x96xf32> to vector<16x32xf32>
    %45 = arith.mulf %43, %27 : vector<16x32xf32>
    %46 = arith.mulf %42, %41 : vector<16x32xf32>
    %47 = arith.addf %45, %46 : vector<16x32xf32>
    %48 = math.tanh %47 : vector<16x32xf32>
    %49 = arith.mulf %44, %48 : vector<16x32xf32>
    %50 = vector.extract_strided_slice %6 {offsets = [32, 0], sizes = [16, 128], strides = [1, 1]} : vector<128x128xf32> to vector<16x128xf32>
    %51 = arith.truncf %49 : vector<16x32xf32> to vector<16x32xbf16>
    %cst_13 = arith.constant dense<0.000000e+00> : vector<16x128xf32>
    %52 = tpu.matmul %51, %7, %cst_13 {dimension_numbers = #tpu.dot_dimension_numbers<[1], [0], [0], [1], [0, 0, 1, 1], [], []>} : vector<16x32xbf16>, vector<32x128xbf16>, vector<16x128xf32> -> vector<16x128xf32>
    %53 = arith.addf %50, %52 : vector<16x128xf32>
    %54 = vector.extract_strided_slice %53 {offsets = [0, 0], sizes = [16, 96], strides = [1, 1]} : vector<16x128xf32> to vector<16x96xf32>
    %55 = arith.negf %54 : vector<16x96xf32>
    %56 = math.exp %55 : vector<16x96xf32>
    %cst_14 = arith.constant 1.000000e+00 : f32
    %57 = vector.broadcast %cst_14 : f32 to vector<16x96xf32>
    %58 = arith.addf %57, %56 : vector<16x96xf32>
    %59 = arith.divf %57, %58 : vector<16x96xf32>
    %60 = vector.extract_strided_slice %53 {offsets = [0, 96], sizes = [16, 32], strides = [1, 1]} : vector<16x128xf32> to vector<16x32xf32>
    %61 = math.tanh %60 : vector<16x32xf32>
    %62 = vector.extract_strided_slice %59 {offsets = [0, 0], sizes = [16, 32], strides = [1, 1]} : vector<16x96xf32> to vector<16x32xf32>
    %63 = vector.extract_strided_slice %59 {offsets = [0, 32], sizes = [16, 32], strides = [1, 1]} : vector<16x96xf32> to vector<16x32xf32>
    %64 = vector.extract_strided_slice %59 {offsets = [0, 64], sizes = [16, 32], strides = [1, 1]} : vector<16x96xf32> to vector<16x32xf32>
    %65 = arith.mulf %63, %47 : vector<16x32xf32>
    %66 = arith.mulf %62, %61 : vector<16x32xf32>
    %67 = arith.addf %65, %66 : vector<16x32xf32>
    %68 = math.tanh %67 : vector<16x32xf32>
    %69 = arith.mulf %64, %68 : vector<16x32xf32>
    %70 = vector.extract_strided_slice %6 {offsets = [48, 0], sizes = [16, 128], strides = [1, 1]} : vector<128x128xf32> to vector<16x128xf32>
    %71 = arith.truncf %69 : vector<16x32xf32> to vector<16x32xbf16>
    %cst_15 = arith.constant dense<0.000000e+00> : vector<16x128xf32>
    %72 = tpu.matmul %71, %7, %cst_15 {dimension_numbers = #tpu.dot_dimension_numbers<[1], [0], [0], [1], [0, 0, 1, 1], [], []>} : vector<16x32xbf16>, vector<32x128xbf16>, vector<16x128xf32> -> vector<16x128xf32>
    %73 = arith.addf %70, %72 : vector<16x128xf32>
    %74 = vector.extract_strided_slice %73 {offsets = [0, 0], sizes = [16, 96], strides = [1, 1]} : vector<16x128xf32> to vector<16x96xf32>
    %75 = arith.negf %74 : vector<16x96xf32>
    %76 = math.exp %75 : vector<16x96xf32>
    %cst_16 = arith.constant 1.000000e+00 : f32
    %77 = vector.broadcast %cst_16 : f32 to vector<16x96xf32>
    %78 = arith.addf %77, %76 : vector<16x96xf32>
    %79 = arith.divf %77, %78 : vector<16x96xf32>
    %80 = vector.extract_strided_slice %73 {offsets = [0, 96], sizes = [16, 32], strides = [1, 1]} : vector<16x128xf32> to vector<16x32xf32>
    %81 = math.tanh %80 : vector<16x32xf32>
    %82 = vector.extract_strided_slice %79 {offsets = [0, 0], sizes = [16, 32], strides = [1, 1]} : vector<16x96xf32> to vector<16x32xf32>
    %83 = vector.extract_strided_slice %79 {offsets = [0, 32], sizes = [16, 32], strides = [1, 1]} : vector<16x96xf32> to vector<16x32xf32>
    %84 = vector.extract_strided_slice %79 {offsets = [0, 64], sizes = [16, 32], strides = [1, 1]} : vector<16x96xf32> to vector<16x32xf32>
    %85 = arith.mulf %83, %67 : vector<16x32xf32>
    %86 = arith.mulf %82, %81 : vector<16x32xf32>
    %87 = arith.addf %85, %86 : vector<16x32xf32>
    %88 = math.tanh %87 : vector<16x32xf32>
    %89 = arith.mulf %84, %88 : vector<16x32xf32>
    %90 = vector.extract_strided_slice %6 {offsets = [64, 0], sizes = [16, 128], strides = [1, 1]} : vector<128x128xf32> to vector<16x128xf32>
    %91 = arith.truncf %89 : vector<16x32xf32> to vector<16x32xbf16>
    %cst_17 = arith.constant dense<0.000000e+00> : vector<16x128xf32>
    %92 = tpu.matmul %91, %7, %cst_17 {dimension_numbers = #tpu.dot_dimension_numbers<[1], [0], [0], [1], [0, 0, 1, 1], [], []>} : vector<16x32xbf16>, vector<32x128xbf16>, vector<16x128xf32> -> vector<16x128xf32>
    %93 = arith.addf %90, %92 : vector<16x128xf32>
    %94 = vector.extract_strided_slice %93 {offsets = [0, 0], sizes = [16, 96], strides = [1, 1]} : vector<16x128xf32> to vector<16x96xf32>
    %95 = arith.negf %94 : vector<16x96xf32>
    %96 = math.exp %95 : vector<16x96xf32>
    %cst_18 = arith.constant 1.000000e+00 : f32
    %97 = vector.broadcast %cst_18 : f32 to vector<16x96xf32>
    %98 = arith.addf %97, %96 : vector<16x96xf32>
    %99 = arith.divf %97, %98 : vector<16x96xf32>
    %100 = vector.extract_strided_slice %93 {offsets = [0, 96], sizes = [16, 32], strides = [1, 1]} : vector<16x128xf32> to vector<16x32xf32>
    %101 = math.tanh %100 : vector<16x32xf32>
    %102 = vector.extract_strided_slice %99 {offsets = [0, 0], sizes = [16, 32], strides = [1, 1]} : vector<16x96xf32> to vector<16x32xf32>
    %103 = vector.extract_strided_slice %99 {offsets = [0, 32], sizes = [16, 32], strides = [1, 1]} : vector<16x96xf32> to vector<16x32xf32>
    %104 = vector.extract_strided_slice %99 {offsets = [0, 64], sizes = [16, 32], strides = [1, 1]} : vector<16x96xf32> to vector<16x32xf32>
    %105 = arith.mulf %103, %87 : vector<16x32xf32>
    %106 = arith.mulf %102, %101 : vector<16x32xf32>
    %107 = arith.addf %105, %106 : vector<16x32xf32>
    %108 = math.tanh %107 : vector<16x32xf32>
    %109 = arith.mulf %104, %108 : vector<16x32xf32>
    %110 = vector.extract_strided_slice %6 {offsets = [80, 0], sizes = [16, 128], strides = [1, 1]} : vector<128x128xf32> to vector<16x128xf32>
    %111 = arith.truncf %109 : vector<16x32xf32> to vector<16x32xbf16>
    %cst_19 = arith.constant dense<0.000000e+00> : vector<16x128xf32>
    %112 = tpu.matmul %111, %7, %cst_19 {dimension_numbers = #tpu.dot_dimension_numbers<[1], [0], [0], [1], [0, 0, 1, 1], [], []>} : vector<16x32xbf16>, vector<32x128xbf16>, vector<16x128xf32> -> vector<16x128xf32>
    %113 = arith.addf %110, %112 : vector<16x128xf32>
    %114 = vector.extract_strided_slice %113 {offsets = [0, 0], sizes = [16, 96], strides = [1, 1]} : vector<16x128xf32> to vector<16x96xf32>
    %115 = arith.negf %114 : vector<16x96xf32>
    %116 = math.exp %115 : vector<16x96xf32>
    %cst_20 = arith.constant 1.000000e+00 : f32
    %117 = vector.broadcast %cst_20 : f32 to vector<16x96xf32>
    %118 = arith.addf %117, %116 : vector<16x96xf32>
    %119 = arith.divf %117, %118 : vector<16x96xf32>
    %120 = vector.extract_strided_slice %113 {offsets = [0, 96], sizes = [16, 32], strides = [1, 1]} : vector<16x128xf32> to vector<16x32xf32>
    %121 = math.tanh %120 : vector<16x32xf32>
    %122 = vector.extract_strided_slice %119 {offsets = [0, 0], sizes = [16, 32], strides = [1, 1]} : vector<16x96xf32> to vector<16x32xf32>
    %123 = vector.extract_strided_slice %119 {offsets = [0, 32], sizes = [16, 32], strides = [1, 1]} : vector<16x96xf32> to vector<16x32xf32>
    %124 = vector.extract_strided_slice %119 {offsets = [0, 64], sizes = [16, 32], strides = [1, 1]} : vector<16x96xf32> to vector<16x32xf32>
    %125 = arith.mulf %123, %107 : vector<16x32xf32>
    %126 = arith.mulf %122, %121 : vector<16x32xf32>
    %127 = arith.addf %125, %126 : vector<16x32xf32>
    %128 = math.tanh %127 : vector<16x32xf32>
    %129 = arith.mulf %124, %128 : vector<16x32xf32>
    %130 = vector.extract_strided_slice %6 {offsets = [96, 0], sizes = [16, 128], strides = [1, 1]} : vector<128x128xf32> to vector<16x128xf32>
    %131 = arith.truncf %129 : vector<16x32xf32> to vector<16x32xbf16>
    %cst_21 = arith.constant dense<0.000000e+00> : vector<16x128xf32>
    %132 = tpu.matmul %131, %7, %cst_21 {dimension_numbers = #tpu.dot_dimension_numbers<[1], [0], [0], [1], [0, 0, 1, 1], [], []>} : vector<16x32xbf16>, vector<32x128xbf16>, vector<16x128xf32> -> vector<16x128xf32>
    %133 = arith.addf %130, %132 : vector<16x128xf32>
    %134 = vector.extract_strided_slice %133 {offsets = [0, 0], sizes = [16, 96], strides = [1, 1]} : vector<16x128xf32> to vector<16x96xf32>
    %135 = arith.negf %134 : vector<16x96xf32>
    %136 = math.exp %135 : vector<16x96xf32>
    %cst_22 = arith.constant 1.000000e+00 : f32
    %137 = vector.broadcast %cst_22 : f32 to vector<16x96xf32>
    %138 = arith.addf %137, %136 : vector<16x96xf32>
    %139 = arith.divf %137, %138 : vector<16x96xf32>
    %140 = vector.extract_strided_slice %133 {offsets = [0, 96], sizes = [16, 32], strides = [1, 1]} : vector<16x128xf32> to vector<16x32xf32>
    %141 = math.tanh %140 : vector<16x32xf32>
    %142 = vector.extract_strided_slice %139 {offsets = [0, 0], sizes = [16, 32], strides = [1, 1]} : vector<16x96xf32> to vector<16x32xf32>
    %143 = vector.extract_strided_slice %139 {offsets = [0, 32], sizes = [16, 32], strides = [1, 1]} : vector<16x96xf32> to vector<16x32xf32>
    %144 = vector.extract_strided_slice %139 {offsets = [0, 64], sizes = [16, 32], strides = [1, 1]} : vector<16x96xf32> to vector<16x32xf32>
    %145 = arith.mulf %143, %127 : vector<16x32xf32>
    %146 = arith.mulf %142, %141 : vector<16x32xf32>
    %147 = arith.addf %145, %146 : vector<16x32xf32>
    %148 = math.tanh %147 : vector<16x32xf32>
    %149 = arith.mulf %144, %148 : vector<16x32xf32>
    %150 = vector.extract_strided_slice %6 {offsets = [112, 0], sizes = [16, 128], strides = [1, 1]} : vector<128x128xf32> to vector<16x128xf32>
    %151 = arith.truncf %149 : vector<16x32xf32> to vector<16x32xbf16>
    %cst_23 = arith.constant dense<0.000000e+00> : vector<16x128xf32>
    %152 = tpu.matmul %151, %7, %cst_23 {dimension_numbers = #tpu.dot_dimension_numbers<[1], [0], [0], [1], [0, 0, 1, 1], [], []>} : vector<16x32xbf16>, vector<32x128xbf16>, vector<16x128xf32> -> vector<16x128xf32>
    %153 = arith.addf %150, %152 : vector<16x128xf32>
    %154 = vector.extract_strided_slice %153 {offsets = [0, 0], sizes = [16, 96], strides = [1, 1]} : vector<16x128xf32> to vector<16x96xf32>
    %155 = arith.negf %154 : vector<16x96xf32>
    %156 = math.exp %155 : vector<16x96xf32>
    %cst_24 = arith.constant 1.000000e+00 : f32
    %157 = vector.broadcast %cst_24 : f32 to vector<16x96xf32>
    %158 = arith.addf %157, %156 : vector<16x96xf32>
    %159 = arith.divf %157, %158 : vector<16x96xf32>
    %160 = vector.extract_strided_slice %153 {offsets = [0, 96], sizes = [16, 32], strides = [1, 1]} : vector<16x128xf32> to vector<16x32xf32>
    %161 = math.tanh %160 : vector<16x32xf32>
    %162 = vector.extract_strided_slice %159 {offsets = [0, 0], sizes = [16, 32], strides = [1, 1]} : vector<16x96xf32> to vector<16x32xf32>
    %163 = vector.extract_strided_slice %159 {offsets = [0, 32], sizes = [16, 32], strides = [1, 1]} : vector<16x96xf32> to vector<16x32xf32>
    %164 = vector.extract_strided_slice %159 {offsets = [0, 64], sizes = [16, 32], strides = [1, 1]} : vector<16x96xf32> to vector<16x32xf32>
    %165 = arith.mulf %163, %147 : vector<16x32xf32>
    %166 = arith.mulf %162, %161 : vector<16x32xf32>
    %167 = arith.addf %165, %166 : vector<16x32xf32>
    %168 = math.tanh %167 : vector<16x32xf32>
    %169 = arith.mulf %164, %168 : vector<16x32xf32>
    %170 = tpu.concatenate %29, %49, %69, %89, %109, %129, %149, %169 in 0 : vector<16x32xf32>, vector<16x32xf32>, vector<16x32xf32>, vector<16x32xf32>, vector<16x32xf32>, vector<16x32xf32>, vector<16x32xf32>, vector<16x32xf32> -> vector<128x32xf32>
    %171 = arith.truncf %170 : vector<128x32xf32> to vector<128x32xbf16>
    %c0_25 = arith.constant 0 : index
    %c0_26 = arith.constant 0 : index
    %172 = vector.load %arg5[%c0_25, %c0_26] : memref<32x128xbf16, #tpu.memory_space<vmem>>, vector<32x128xbf16>
    %cst_27 = arith.constant dense<0.000000e+00> : vector<128x128xf32>
    %173 = tpu.matmul %171, %172, %cst_27 {dimension_numbers = #tpu.dot_dimension_numbers<[1], [0], [0], [1], [0, 0, 1, 1], [], []>} : vector<128x32xbf16>, vector<32x128xbf16>, vector<128x128xf32> -> vector<128x128xf32>
    %c0_28 = arith.constant 0 : index
    %c0_29 = arith.constant 0 : index
    %174 = vector.load %arg7[%c0_28, %c0_29] : memref<1x128xf32, #tpu.memory_space<vmem>>, vector<1x128xf32>
    %175 = vector.broadcast %174 : vector<1x128xf32> to vector<128x128xf32>
    %176 = arith.addf %173, %175 : vector<128x128xf32>
    %c0_30 = arith.constant 0 : index
    %c0_31 = arith.constant 0 : index
    %177 = vector.load %arg6[%c0_30, %c0_31] : memref<32x128xbf16, #tpu.memory_space<vmem>>, vector<32x128xbf16>
    %cst_32 = arith.constant 0.000000e+00 : f32
    %178 = vector.broadcast %cst_32 : f32 to vector<16x32xf32>
    %cst_33 = arith.constant 0.000000e+00 : f32
    %179 = vector.broadcast %cst_33 : f32 to vector<16x32xf32>
    %180 = vector.extract_strided_slice %176 {offsets = [0, 0], sizes = [16, 128], strides = [1, 1]} : vector<128x128xf32> to vector<16x128xf32>
    %181 = arith.truncf %178 : vector<16x32xf32> to vector<16x32xbf16>
    %cst_34 = arith.constant dense<0.000000e+00> : vector<16x128xf32>
    %182 = tpu.matmul %181, %177, %cst_34 {dimension_numbers = #tpu.dot_dimension_numbers<[1], [0], [0], [1], [0, 0, 1, 1], [], []>} : vector<16x32xbf16>, vector<32x128xbf16>, vector<16x128xf32> -> vector<16x128xf32>
    %183 = arith.addf %180, %182 : vector<16x128xf32>
    %184 = vector.extract_strided_slice %183 {offsets = [0, 0], sizes = [16, 96], strides = [1, 1]} : vector<16x128xf32> to vector<16x96xf32>
    %185 = arith.negf %184 : vector<16x96xf32>
    %186 = math.exp %185 : vector<16x96xf32>
    %cst_35 = arith.constant 1.000000e+00 : f32
    %187 = vector.broadcast %cst_35 : f32 to vector<16x96xf32>
    %188 = arith.addf %187, %186 : vector<16x96xf32>
    %189 = arith.divf %187, %188 : vector<16x96xf32>
    %190 = vector.extract_strided_slice %183 {offsets = [0, 96], sizes = [16, 32], strides = [1, 1]} : vector<16x128xf32> to vector<16x32xf32>
    %191 = math.tanh %190 : vector<16x32xf32>
    %192 = vector.extract_strided_slice %189 {offsets = [0, 0], sizes = [16, 32], strides = [1, 1]} : vector<16x96xf32> to vector<16x32xf32>
    %193 = vector.extract_strided_slice %189 {offsets = [0, 32], sizes = [16, 32], strides = [1, 1]} : vector<16x96xf32> to vector<16x32xf32>
    %194 = vector.extract_strided_slice %189 {offsets = [0, 64], sizes = [16, 32], strides = [1, 1]} : vector<16x96xf32> to vector<16x32xf32>
    %195 = arith.mulf %193, %179 : vector<16x32xf32>
    %196 = arith.mulf %192, %191 : vector<16x32xf32>
    %197 = arith.addf %195, %196 : vector<16x32xf32>
    %198 = math.tanh %197 : vector<16x32xf32>
    %199 = arith.mulf %194, %198 : vector<16x32xf32>
    %200 = vector.extract_strided_slice %176 {offsets = [16, 0], sizes = [16, 128], strides = [1, 1]} : vector<128x128xf32> to vector<16x128xf32>
    %201 = arith.truncf %199 : vector<16x32xf32> to vector<16x32xbf16>
    %cst_36 = arith.constant dense<0.000000e+00> : vector<16x128xf32>
    %202 = tpu.matmul %201, %177, %cst_36 {dimension_numbers = #tpu.dot_dimension_numbers<[1], [0], [0], [1], [0, 0, 1, 1], [], []>} : vector<16x32xbf16>, vector<32x128xbf16>, vector<16x128xf32> -> vector<16x128xf32>
    %203 = arith.addf %200, %202 : vector<16x128xf32>
    %204 = vector.extract_strided_slice %203 {offsets = [0, 0], sizes = [16, 96], strides = [1, 1]} : vector<16x128xf32> to vector<16x96xf32>
    %205 = arith.negf %204 : vector<16x96xf32>
    %206 = math.exp %205 : vector<16x96xf32>
    %cst_37 = arith.constant 1.000000e+00 : f32
    %207 = vector.broadcast %cst_37 : f32 to vector<16x96xf32>
    %208 = arith.addf %207, %206 : vector<16x96xf32>
    %209 = arith.divf %207, %208 : vector<16x96xf32>
    %210 = vector.extract_strided_slice %203 {offsets = [0, 96], sizes = [16, 32], strides = [1, 1]} : vector<16x128xf32> to vector<16x32xf32>
    %211 = math.tanh %210 : vector<16x32xf32>
    %212 = vector.extract_strided_slice %209 {offsets = [0, 0], sizes = [16, 32], strides = [1, 1]} : vector<16x96xf32> to vector<16x32xf32>
    %213 = vector.extract_strided_slice %209 {offsets = [0, 32], sizes = [16, 32], strides = [1, 1]} : vector<16x96xf32> to vector<16x32xf32>
    %214 = vector.extract_strided_slice %209 {offsets = [0, 64], sizes = [16, 32], strides = [1, 1]} : vector<16x96xf32> to vector<16x32xf32>
    %215 = arith.mulf %213, %197 : vector<16x32xf32>
    %216 = arith.mulf %212, %211 : vector<16x32xf32>
    %217 = arith.addf %215, %216 : vector<16x32xf32>
    %218 = math.tanh %217 : vector<16x32xf32>
    %219 = arith.mulf %214, %218 : vector<16x32xf32>
    %220 = vector.extract_strided_slice %176 {offsets = [32, 0], sizes = [16, 128], strides = [1, 1]} : vector<128x128xf32> to vector<16x128xf32>
    %221 = arith.truncf %219 : vector<16x32xf32> to vector<16x32xbf16>
    %cst_38 = arith.constant dense<0.000000e+00> : vector<16x128xf32>
    %222 = tpu.matmul %221, %177, %cst_38 {dimension_numbers = #tpu.dot_dimension_numbers<[1], [0], [0], [1], [0, 0, 1, 1], [], []>} : vector<16x32xbf16>, vector<32x128xbf16>, vector<16x128xf32> -> vector<16x128xf32>
    %223 = arith.addf %220, %222 : vector<16x128xf32>
    %224 = vector.extract_strided_slice %223 {offsets = [0, 0], sizes = [16, 96], strides = [1, 1]} : vector<16x128xf32> to vector<16x96xf32>
    %225 = arith.negf %224 : vector<16x96xf32>
    %226 = math.exp %225 : vector<16x96xf32>
    %cst_39 = arith.constant 1.000000e+00 : f32
    %227 = vector.broadcast %cst_39 : f32 to vector<16x96xf32>
    %228 = arith.addf %227, %226 : vector<16x96xf32>
    %229 = arith.divf %227, %228 : vector<16x96xf32>
    %230 = vector.extract_strided_slice %223 {offsets = [0, 96], sizes = [16, 32], strides = [1, 1]} : vector<16x128xf32> to vector<16x32xf32>
    %231 = math.tanh %230 : vector<16x32xf32>
    %232 = vector.extract_strided_slice %229 {offsets = [0, 0], sizes = [16, 32], strides = [1, 1]} : vector<16x96xf32> to vector<16x32xf32>
    %233 = vector.extract_strided_slice %229 {offsets = [0, 32], sizes = [16, 32], strides = [1, 1]} : vector<16x96xf32> to vector<16x32xf32>
    %234 = vector.extract_strided_slice %229 {offsets = [0, 64], sizes = [16, 32], strides = [1, 1]} : vector<16x96xf32> to vector<16x32xf32>
    %235 = arith.mulf %233, %217 : vector<16x32xf32>
    %236 = arith.mulf %232, %231 : vector<16x32xf32>
    %237 = arith.addf %235, %236 : vector<16x32xf32>
    %238 = math.tanh %237 : vector<16x32xf32>
    %239 = arith.mulf %234, %238 : vector<16x32xf32>
    %240 = vector.extract_strided_slice %176 {offsets = [48, 0], sizes = [16, 128], strides = [1, 1]} : vector<128x128xf32> to vector<16x128xf32>
    %241 = arith.truncf %239 : vector<16x32xf32> to vector<16x32xbf16>
    %cst_40 = arith.constant dense<0.000000e+00> : vector<16x128xf32>
    %242 = tpu.matmul %241, %177, %cst_40 {dimension_numbers = #tpu.dot_dimension_numbers<[1], [0], [0], [1], [0, 0, 1, 1], [], []>} : vector<16x32xbf16>, vector<32x128xbf16>, vector<16x128xf32> -> vector<16x128xf32>
    %243 = arith.addf %240, %242 : vector<16x128xf32>
    %244 = vector.extract_strided_slice %243 {offsets = [0, 0], sizes = [16, 96], strides = [1, 1]} : vector<16x128xf32> to vector<16x96xf32>
    %245 = arith.negf %244 : vector<16x96xf32>
    %246 = math.exp %245 : vector<16x96xf32>
    %cst_41 = arith.constant 1.000000e+00 : f32
    %247 = vector.broadcast %cst_41 : f32 to vector<16x96xf32>
    %248 = arith.addf %247, %246 : vector<16x96xf32>
    %249 = arith.divf %247, %248 : vector<16x96xf32>
    %250 = vector.extract_strided_slice %243 {offsets = [0, 96], sizes = [16, 32], strides = [1, 1]} : vector<16x128xf32> to vector<16x32xf32>
    %251 = math.tanh %250 : vector<16x32xf32>
    %252 = vector.extract_strided_slice %249 {offsets = [0, 0], sizes = [16, 32], strides = [1, 1]} : vector<16x96xf32> to vector<16x32xf32>
    %253 = vector.extract_strided_slice %249 {offsets = [0, 32], sizes = [16, 32], strides = [1, 1]} : vector<16x96xf32> to vector<16x32xf32>
    %254 = vector.extract_strided_slice %249 {offsets = [0, 64], sizes = [16, 32], strides = [1, 1]} : vector<16x96xf32> to vector<16x32xf32>
    %255 = arith.mulf %253, %237 : vector<16x32xf32>
    %256 = arith.mulf %252, %251 : vector<16x32xf32>
    %257 = arith.addf %255, %256 : vector<16x32xf32>
    %258 = math.tanh %257 : vector<16x32xf32>
    %259 = arith.mulf %254, %258 : vector<16x32xf32>
    %260 = vector.extract_strided_slice %176 {offsets = [64, 0], sizes = [16, 128], strides = [1, 1]} : vector<128x128xf32> to vector<16x128xf32>
    %261 = arith.truncf %259 : vector<16x32xf32> to vector<16x32xbf16>
    %cst_42 = arith.constant dense<0.000000e+00> : vector<16x128xf32>
    %262 = tpu.matmul %261, %177, %cst_42 {dimension_numbers = #tpu.dot_dimension_numbers<[1], [0], [0], [1], [0, 0, 1, 1], [], []>} : vector<16x32xbf16>, vector<32x128xbf16>, vector<16x128xf32> -> vector<16x128xf32>
    %263 = arith.addf %260, %262 : vector<16x128xf32>
    %264 = vector.extract_strided_slice %263 {offsets = [0, 0], sizes = [16, 96], strides = [1, 1]} : vector<16x128xf32> to vector<16x96xf32>
    %265 = arith.negf %264 : vector<16x96xf32>
    %266 = math.exp %265 : vector<16x96xf32>
    %cst_43 = arith.constant 1.000000e+00 : f32
    %267 = vector.broadcast %cst_43 : f32 to vector<16x96xf32>
    %268 = arith.addf %267, %266 : vector<16x96xf32>
    %269 = arith.divf %267, %268 : vector<16x96xf32>
    %270 = vector.extract_strided_slice %263 {offsets = [0, 96], sizes = [16, 32], strides = [1, 1]} : vector<16x128xf32> to vector<16x32xf32>
    %271 = math.tanh %270 : vector<16x32xf32>
    %272 = vector.extract_strided_slice %269 {offsets = [0, 0], sizes = [16, 32], strides = [1, 1]} : vector<16x96xf32> to vector<16x32xf32>
    %273 = vector.extract_strided_slice %269 {offsets = [0, 32], sizes = [16, 32], strides = [1, 1]} : vector<16x96xf32> to vector<16x32xf32>
    %274 = vector.extract_strided_slice %269 {offsets = [0, 64], sizes = [16, 32], strides = [1, 1]} : vector<16x96xf32> to vector<16x32xf32>
    %275 = arith.mulf %273, %257 : vector<16x32xf32>
    %276 = arith.mulf %272, %271 : vector<16x32xf32>
    %277 = arith.addf %275, %276 : vector<16x32xf32>
    %278 = math.tanh %277 : vector<16x32xf32>
    %279 = arith.mulf %274, %278 : vector<16x32xf32>
    %280 = vector.extract_strided_slice %176 {offsets = [80, 0], sizes = [16, 128], strides = [1, 1]} : vector<128x128xf32> to vector<16x128xf32>
    %281 = arith.truncf %279 : vector<16x32xf32> to vector<16x32xbf16>
    %cst_44 = arith.constant dense<0.000000e+00> : vector<16x128xf32>
    %282 = tpu.matmul %281, %177, %cst_44 {dimension_numbers = #tpu.dot_dimension_numbers<[1], [0], [0], [1], [0, 0, 1, 1], [], []>} : vector<16x32xbf16>, vector<32x128xbf16>, vector<16x128xf32> -> vector<16x128xf32>
    %283 = arith.addf %280, %282 : vector<16x128xf32>
    %284 = vector.extract_strided_slice %283 {offsets = [0, 0], sizes = [16, 96], strides = [1, 1]} : vector<16x128xf32> to vector<16x96xf32>
    %285 = arith.negf %284 : vector<16x96xf32>
    %286 = math.exp %285 : vector<16x96xf32>
    %cst_45 = arith.constant 1.000000e+00 : f32
    %287 = vector.broadcast %cst_45 : f32 to vector<16x96xf32>
    %288 = arith.addf %287, %286 : vector<16x96xf32>
    %289 = arith.divf %287, %288 : vector<16x96xf32>
    %290 = vector.extract_strided_slice %283 {offsets = [0, 96], sizes = [16, 32], strides = [1, 1]} : vector<16x128xf32> to vector<16x32xf32>
    %291 = math.tanh %290 : vector<16x32xf32>
    %292 = vector.extract_strided_slice %289 {offsets = [0, 0], sizes = [16, 32], strides = [1, 1]} : vector<16x96xf32> to vector<16x32xf32>
    %293 = vector.extract_strided_slice %289 {offsets = [0, 32], sizes = [16, 32], strides = [1, 1]} : vector<16x96xf32> to vector<16x32xf32>
    %294 = vector.extract_strided_slice %289 {offsets = [0, 64], sizes = [16, 32], strides = [1, 1]} : vector<16x96xf32> to vector<16x32xf32>
    %295 = arith.mulf %293, %277 : vector<16x32xf32>
    %296 = arith.mulf %292, %291 : vector<16x32xf32>
    %297 = arith.addf %295, %296 : vector<16x32xf32>
    %298 = math.tanh %297 : vector<16x32xf32>
    %299 = arith.mulf %294, %298 : vector<16x32xf32>
    %300 = vector.extract_strided_slice %176 {offsets = [96, 0], sizes = [16, 128], strides = [1, 1]} : vector<128x128xf32> to vector<16x128xf32>
    %301 = arith.truncf %299 : vector<16x32xf32> to vector<16x32xbf16>
    %cst_46 = arith.constant dense<0.000000e+00> : vector<16x128xf32>
    %302 = tpu.matmul %301, %177, %cst_46 {dimension_numbers = #tpu.dot_dimension_numbers<[1], [0], [0], [1], [0, 0, 1, 1], [], []>} : vector<16x32xbf16>, vector<32x128xbf16>, vector<16x128xf32> -> vector<16x128xf32>
    %303 = arith.addf %300, %302 : vector<16x128xf32>
    %304 = vector.extract_strided_slice %303 {offsets = [0, 0], sizes = [16, 96], strides = [1, 1]} : vector<16x128xf32> to vector<16x96xf32>
    %305 = arith.negf %304 : vector<16x96xf32>
    %306 = math.exp %305 : vector<16x96xf32>
    %cst_47 = arith.constant 1.000000e+00 : f32
    %307 = vector.broadcast %cst_47 : f32 to vector<16x96xf32>
    %308 = arith.addf %307, %306 : vector<16x96xf32>
    %309 = arith.divf %307, %308 : vector<16x96xf32>
    %310 = vector.extract_strided_slice %303 {offsets = [0, 96], sizes = [16, 32], strides = [1, 1]} : vector<16x128xf32> to vector<16x32xf32>
    %311 = math.tanh %310 : vector<16x32xf32>
    %312 = vector.extract_strided_slice %309 {offsets = [0, 0], sizes = [16, 32], strides = [1, 1]} : vector<16x96xf32> to vector<16x32xf32>
    %313 = vector.extract_strided_slice %309 {offsets = [0, 32], sizes = [16, 32], strides = [1, 1]} : vector<16x96xf32> to vector<16x32xf32>
    %314 = vector.extract_strided_slice %309 {offsets = [0, 64], sizes = [16, 32], strides = [1, 1]} : vector<16x96xf32> to vector<16x32xf32>
    %315 = arith.mulf %313, %297 : vector<16x32xf32>
    %316 = arith.mulf %312, %311 : vector<16x32xf32>
    %317 = arith.addf %315, %316 : vector<16x32xf32>
    %318 = math.tanh %317 : vector<16x32xf32>
    %319 = arith.mulf %314, %318 : vector<16x32xf32>
    %320 = vector.extract_strided_slice %176 {offsets = [112, 0], sizes = [16, 128], strides = [1, 1]} : vector<128x128xf32> to vector<16x128xf32>
    %321 = arith.truncf %319 : vector<16x32xf32> to vector<16x32xbf16>
    %cst_48 = arith.constant dense<0.000000e+00> : vector<16x128xf32>
    %322 = tpu.matmul %321, %177, %cst_48 {dimension_numbers = #tpu.dot_dimension_numbers<[1], [0], [0], [1], [0, 0, 1, 1], [], []>} : vector<16x32xbf16>, vector<32x128xbf16>, vector<16x128xf32> -> vector<16x128xf32>
    %323 = arith.addf %320, %322 : vector<16x128xf32>
    %324 = vector.extract_strided_slice %323 {offsets = [0, 0], sizes = [16, 96], strides = [1, 1]} : vector<16x128xf32> to vector<16x96xf32>
    %325 = arith.negf %324 : vector<16x96xf32>
    %326 = math.exp %325 : vector<16x96xf32>
    %cst_49 = arith.constant 1.000000e+00 : f32
    %327 = vector.broadcast %cst_49 : f32 to vector<16x96xf32>
    %328 = arith.addf %327, %326 : vector<16x96xf32>
    %329 = arith.divf %327, %328 : vector<16x96xf32>
    %330 = vector.extract_strided_slice %323 {offsets = [0, 96], sizes = [16, 32], strides = [1, 1]} : vector<16x128xf32> to vector<16x32xf32>
    %331 = math.tanh %330 : vector<16x32xf32>
    %332 = vector.extract_strided_slice %329 {offsets = [0, 0], sizes = [16, 32], strides = [1, 1]} : vector<16x96xf32> to vector<16x32xf32>
    %333 = vector.extract_strided_slice %329 {offsets = [0, 32], sizes = [16, 32], strides = [1, 1]} : vector<16x96xf32> to vector<16x32xf32>
    %334 = vector.extract_strided_slice %329 {offsets = [0, 64], sizes = [16, 32], strides = [1, 1]} : vector<16x96xf32> to vector<16x32xf32>
    %335 = arith.mulf %333, %317 : vector<16x32xf32>
    %336 = arith.mulf %332, %331 : vector<16x32xf32>
    %337 = arith.addf %335, %336 : vector<16x32xf32>
    %338 = math.tanh %337 : vector<16x32xf32>
    %339 = arith.mulf %334, %338 : vector<16x32xf32>
    %340 = arith.truncf %339 : vector<16x32xf32> to vector<16x32xbf16>
    %c0_50 = arith.constant 0 : index
    %c0_51 = arith.constant 0 : index
    %341 = vector.load %arg8[%c0_50, %c0_51] : memref<32x4xbf16, #tpu.memory_space<vmem>>, vector<32x4xbf16>
    %cst_52 = arith.constant dense<0.000000e+00> : vector<16x4xf32>
    %342 = tpu.matmul %340, %341, %cst_52 {dimension_numbers = #tpu.dot_dimension_numbers<[1], [0], [0], [1], [0, 0, 1, 1], [], []>} : vector<16x32xbf16>, vector<32x4xbf16>, vector<16x4xf32> -> vector<16x4xf32>
    %c0_53 = arith.constant 0 : index
    %c0_54 = arith.constant 0 : index
    %343 = vector.load %arg9[%c0_53, %c0_54] : memref<1x4xf32, #tpu.memory_space<vmem>>, vector<1x4xf32>
    %344 = vector.broadcast %343 : vector<1x4xf32> to vector<16x4xf32>
    %345 = arith.addf %342, %344 : vector<16x4xf32>
    %c0_55 = arith.constant 0 : index
    %c0_56 = arith.constant 0 : index
    %346 = vector.load %arg10[%c0_55, %c0_56] : memref<16x4xf32, #tpu.memory_space<vmem>>, vector<16x4xf32>
    tpu.vector_store %arg10[%c0_55, %c0_56], %345 {strides = array<i32>} : memref<16x4xf32, #tpu.memory_space<vmem>>, vector<16x4xf32>,
    return
  }
  func.func @transform_0(%arg0: i32) -> (i32, i32) {
    %c0_i32 = arith.constant 0 : i32
    %c0_i32_0 = arith.constant 0 : i32
    return %arg0, %c0_i32 : i32, i32
  }
  func.func @transform_1(%arg0: i32) -> (i32, i32) {
    %c0_i32 = arith.constant 0 : i32
    %c0_i32_0 = arith.constant 0 : i32
    %c0_i32_1 = arith.constant 0 : i32
    return %c0_i32, %c0_i32_0 : i32, i32
  }
  func.func @transform_2(%arg0: i32) -> (i32, i32) {
    %c0_i32 = arith.constant 0 : i32
    %c0_i32_0 = arith.constant 0 : i32
    %c0_i32_1 = arith.constant 0 : i32
    return %c0_i32, %c0_i32_0 : i32, i32
  }
  func.func @transform_3(%arg0: i32) -> (i32, i32) {
    %c0_i32 = arith.constant 0 : i32
    %c0_i32_0 = arith.constant 0 : i32
    %c0_i32_1 = arith.constant 0 : i32
    return %c0_i32, %c0_i32_0 : i32, i32
  }
  func.func @transform_4(%arg0: i32) -> (i32, i32) {
    %c0_i32 = arith.constant 0 : i32
    %c0_i32_0 = arith.constant 0 : i32
    %c0_i32_1 = arith.constant 0 : i32
    return %c0_i32, %c0_i32_0 : i32, i32
  }
  func.func @transform_5(%arg0: i32) -> (i32, i32) {
    %c0_i32 = arith.constant 0 : i32
    %c0_i32_0 = arith.constant 0 : i32
    %c0_i32_1 = arith.constant 0 : i32
    return %c0_i32, %c0_i32_0 : i32, i32
  }
  func.func @transform_6(%arg0: i32) -> (i32, i32) {
    %c0_i32 = arith.constant 0 : i32
    %c0_i32_0 = arith.constant 0 : i32
    %c0_i32_1 = arith.constant 0 : i32
    return %c0_i32, %c0_i32_0 : i32, i32
  }
  func.func @transform_7(%arg0: i32) -> (i32, i32) {
    %c0_i32 = arith.constant 0 : i32
    %c0_i32_0 = arith.constant 0 : i32
    %c0_i32_1 = arith.constant 0 : i32
    return %c0_i32, %c0_i32_0 : i32, i32
  }
  func.func @transform_8(%arg0: i32) -> (i32, i32) {
    %c0_i32 = arith.constant 0 : i32
    %c0_i32_0 = arith.constant 0 : i32
    %c0_i32_1 = arith.constant 0 : i32
    return %c0_i32, %c0_i32_0 : i32, i32
  }
  func.func @transform_9(%arg0: i32) -> (i32, i32) {
    %c0_i32 = arith.constant 0 : i32
    %c0_i32_0 = arith.constant 0 : i32
    return %arg0, %c0_i32 : i32, i32
  }
}

</mosaic_0001>

<llo_original>
// kernel: lstm_model_forward.1
$region0: #{lstm_model_forward.1}
  #allocation0 [shape = 'u32[]', space=smem, size = 0x4, offset = 0x4, fixed_abs, tag = 'smem constant byte address 0x4 - core index']
  #allocation1 [shape = 'u32[72,128]{1,0:T(1,128)}', space=vmem, size = 0x9000, scoped, tag = 'internal scratch']
  %s0 = inlined_call_operand.vmem [shape: f32[128,16], index: 0, kind: input, shape index: {}]
  %s1 = inlined_call_operand.vmem [shape: bf16[16,128], index: 1, kind: input, shape index: {}]
  %s2 = inlined_call_operand.vmem [shape: bf16[32,128], index: 2, kind: input, shape index: {}]
  %s3 = inlined_call_operand.vmem [shape: f32[1,128], index: 3, kind: input, shape index: {}]
  %s4 = inlined_call_operand.vmem [shape: bf16[32,128], index: 4, kind: input, shape index: {}]
  %s5 = inlined_call_operand.vmem [shape: bf16[32,128], index: 5, kind: input, shape index: {}]
  %s6 = inlined_call_operand.vmem [shape: f32[1,128], index: 6, kind: input, shape index: {}]
  %s7 = inlined_call_operand.vmem [shape: bf16[32,4], index: 7, kind: input, shape index: {}]
  %s8 = inlined_call_operand.vmem [shape: f32[1,4], index: 8, kind: input, shape index: {}]
  %s9 = inlined_call_operand.vmem [shape: f32[16,4], index: 9, kind: output, shape index: {}]
  %s10 = sld [smem:[#allocation0]]
  $region46: #{lstm_model_forward.1} parent=0
    _
  %s12 = ssub.s32 1, %s10
  %s13 = scalar_select 0, %s12, %s10
  // Predicated region
  $region2: #{lstm_model_forward.1} parent=0 // pred_check
    _
  $region3: #{lstm_model_forward.1} parent=0 // pred_check_branch
    %15 = sbr.rel (0) target = $region5
  $region4: #{lstm_model_forward.1} parent=0 // pred_region
    _
  $region5: #{lstm_model_forward.1} parent=0 // pred_fallthru
    _
  // Predicated region
  $region6: #{lstm_model_forward.1} parent=0 // pred_check
    _
  $region7: #{lstm_model_forward.1} parent=0 // pred_check_branch
    %17 = sbr.rel (0) target = $region9
  $region8: #{lstm_model_forward.1} parent=0 // pred_region
    _
  $region9: #{lstm_model_forward.1} parent=0 // pred_fallthru
    _
  // Predicated region
  $region10: #{lstm_model_forward.1} parent=0 // pred_check
    _
  $region11: #{lstm_model_forward.1} parent=0 // pred_check_branch
    %19 = sbr.rel (0) target = $region13
  $region12: #{lstm_model_forward.1} parent=0 // pred_region
    _
  $region13: #{lstm_model_forward.1} parent=0 // pred_fallthru
    _
  // Predicated region
  $region14: #{lstm_model_forward.1} parent=0 // pred_check
    _
  $region15: #{lstm_model_forward.1} parent=0 // pred_check_branch
    %21 = sbr.rel (0) target = $region17
  $region16: #{lstm_model_forward.1} parent=0 // pred_region
    _
  $region17: #{lstm_model_forward.1} parent=0 // pred_fallthru
    _
  // Predicated region
  $region18: #{lstm_model_forward.1} parent=0 // pred_check
    _
  $region19: #{lstm_model_forward.1} parent=0 // pred_check_branch
    %23 = sbr.rel (0) target = $region21
  $region20: #{lstm_model_forward.1} parent=0 // pred_region
    _
  $region21: #{lstm_model_forward.1} parent=0 // pred_fallthru
    _
  // Predicated region
  $region22: #{lstm_model_forward.1} parent=0 // pred_check
    _
  $region23: #{lstm_model_forward.1} parent=0 // pred_check_branch
    %25 = sbr.rel (0) target = $region25
  $region24: #{lstm_model_forward.1} parent=0 // pred_region
    _
  $region25: #{lstm_model_forward.1} parent=0 // pred_fallthru
    _
  // Predicated region
  $region26: #{lstm_model_forward.1} parent=0 // pred_check
    _
  $region27: #{lstm_model_forward.1} parent=0 // pred_check_branch
    %27 = sbr.rel (0) target = $region29
  $region28: #{lstm_model_forward.1} parent=0 // pred_region
    _
  $region29: #{lstm_model_forward.1} parent=0 // pred_fallthru
    _
  // Predicated region
  $region30: #{lstm_model_forward.1} parent=0 // pred_check
    _
  $region31: #{lstm_model_forward.1} parent=0 // pred_check_branch
    %29 = sbr.rel (0) target = $region33
  $region32: #{lstm_model_forward.1} parent=0 // pred_region
    _
  $region33: #{lstm_model_forward.1} parent=0 // pred_fallthru
    _
  // Predicated region
  $region34: #{lstm_model_forward.1} parent=0 // pred_check
    _
  $region35: #{lstm_model_forward.1} parent=0 // pred_check_branch
    %31 = sbr.rel (0) target = $region37
  $region36: #{lstm_model_forward.1} parent=0 // pred_region
    _
  $region37: #{lstm_model_forward.1} parent=0 // pred_fallthru
    _
  %v33 = vld [vmem:[%s0] sm:$0xff]
  %v34 = vld [vmem:[%s0 + $0x8] sm:$0xff]
  %v35 = vld [vmem:[%s0 + $0x10] sm:$0xff]
  %v36 = vld [vmem:[%s0 + $0x18] sm:$0xff]
  %v37 = vld [vmem:[%s0 + $0x20] sm:$0xff]
  %v38 = vld [vmem:[%s0 + $0x28] sm:$0xff]
  %v39 = vld [vmem:[%s0 + $0x30] sm:$0xff]
  %v40 = vld [vmem:[%s0 + $0x38] sm:$0xff]
  %v41 = vld [vmem:[%s0 + $0x40] sm:$0xff]
  %v42 = vld [vmem:[%s0 + $0x48] sm:$0xff]
  %v43 = vld [vmem:[%s0 + $0x50] sm:$0xff]
  %v44 = vld [vmem:[%s0 + $0x58] sm:$0xff]
  %v45 = vld [vmem:[%s0 + $0x60] sm:$0xff]
  %v46 = vld [vmem:[%s0 + $0x68] sm:$0xff]
  %v47 = vld [vmem:[%s0 + $0x70] sm:$0xff]
  %v48 = vld [vmem:[%s0 + $0x78] sm:$0xff]
  %v49 = vpack.c.bf16 %v34, %v33
  %v50 = vpack.c.bf16 %v36, %v35
  %v51 = vpack.c.bf16 %v38, %v37
  %v52 = vpack.c.bf16 %v40, %v39
  %v53 = vpack.c.bf16 %v42, %v41
  %v54 = vpack.c.bf16 %v44, %v43
  %v55 = vpack.c.bf16 %v46, %v45
  %v56 = vpack.c.bf16 %v48, %v47
  %v57 = vld [vmem:[%s1] sm:$0xf]
  %v58 = vld [vmem:[%s1 + $0x4] sm:$0xf]
  %v59 = vld [vmem:[%s3] sm:$0x1]
  %v61 = vperm.slane %v59, 0
  %v65 = vunpack.c.l.b16 %v57
  %v66 = vunpack.c.l.b16 %v58
  %v67 = vpack.c.b16 %v66, %v65
  %vm69 = vcmask 130048
  %v71 = vsel %vm69, %v49, 0
  %v74 = vsel %vm69, %v50, 0
  %v77 = vsel %vm69, %v51, 0
  %v80 = vsel %vm69, %v52, 0
  %v83 = vsel %vm69, %v53, 0
  %v86 = vsel %vm69, %v54, 0
  %v89 = vsel %vm69, %v55, 0
  %v92 = vsel %vm69, %v56, 0
  %94 = vmatpush.bf16.msra.mxu0 0
  %95 = vmatpush.bf16.msra.mxu0 0
  %96 = vmatpush.bf16.msra.mxu0 0
  %97 = vmatpush.bf16.msra.mxu0 0
  %98 = vmatpush.bf16.msra.mxu0 0
  %99 = vmatpush.bf16.msra.mxu0 0
  %100 = vmatpush.bf16.msra.mxu0 0
  %101 = vmatpush.bf16.msra.mxu0 %v67
  %102 = vmatmul.bf16.gmra.mxu0 %v71
  %v103 = vpop.f32.mrf.mxu0
  %v104 = vadd.f32 %v61, %v103
  %v105 = vpop.f32.mrf.mxu0
  %v106 = vadd.f32 %v61, %v105
  %107 = vmatmul.bf16.gmra.mxu0 %v74
  %v108 = vpop.f32.mrf.mxu0
  %v109 = vadd.f32 %v61, %v108
  %v110 = vpop.f32.mrf.mxu0
  %v111 = vadd.f32 %v61, %v110
  %112 = vmatmul.bf16.gmra.mxu0 %v77
  %v113 = vpop.f32.mrf.mxu0
  %v114 = vadd.f32 %v61, %v113
  %v115 = vpop.f32.mrf.mxu0
  %v116 = vadd.f32 %v61, %v115
  %117 = vmatmul.bf16.gmra.mxu0 %v80
  %v118 = vpop.f32.mrf.mxu0
  %v119 = vadd.f32 %v61, %v118
  %v120 = vpop.f32.mrf.mxu0
  %v121 = vadd.f32 %v61, %v120
  %122 = vmatmul.bf16.gmra.mxu0 %v83
  %v123 = vpop.f32.mrf.mxu0
  %v124 = vadd.f32 %v61, %v123
  %v125 = vpop.f32.mrf.mxu0
  %v126 = vadd.f32 %v61, %v125
  %127 = vmatmul.bf16.gmra.mxu0 %v86
  %v128 = vpop.f32.mrf.mxu0
  %v129 = vadd.f32 %v61, %v128
  %v130 = vpop.f32.mrf.mxu0
  %v131 = vadd.f32 %v61, %v130
  %132 = vmatmul.bf16.gmra.mxu0 %v89
  %v133 = vpop.f32.mrf.mxu0
  %v134 = vadd.f32 %v61, %v133
  %v135 = vpop.f32.mrf.mxu0
  %v136 = vadd.f32 %v61, %v135
  %137 = vmatmul.bf16.gmra.mxu0 %v92
  %v138 = vpop.f32.mrf.mxu0
  %v139 = vadd.f32 %v61, %v138
  %v140 = vpop.f32.mrf.mxu0
  %v141 = vadd.f32 %v61, %v140
  %142 = vdwg.mxu0
  %v143 = vld [vmem:[%s2] sm:$0xf]
  %v144 = vld [vmem:[%s2 + $0x4] sm:$0xf]
  %v145 = vld [vmem:[%s2 + $0x8] sm:$0xf]
  %v146 = vld [vmem:[%s2 + $0xc] sm:$0xf]
  %v151 = vunpack.c.l.b16 %v143
  %v152 = vunpack.c.l.b16 %v144
  %v153 = vunpack.c.l.b16 %v145
  %v154 = vunpack.c.l.b16 %v146
  %v155 = vpack.c.b16 %v152, %v151
  %v156 = vpack.c.b16 %v154, %v153
  %vm159 = vcmask 261120
  %v161 = vsel %vm159, 0, 0
  %163 = vmatpush.bf16.msra.mxu0 0
  %164 = vmatpush.bf16.msra.mxu0 0
  %165 = vmatpush.bf16.msra.mxu0 0
  %166 = vmatpush.bf16.msra.mxu0 0
  %167 = vmatpush.bf16.msra.mxu0 0
  %168 = vmatpush.bf16.msra.mxu0 0
  %169 = vmatpush.bf16.msra.mxu0 %v156
  %170 = vmatpush.bf16.msra.mxu0 %v155
  %171 = vmatmul.bf16.gmra.mxu0 %v161
  %v172 = vpop.f32.mrf.mxu0
  %v173 = vadd.f32 0.0, %v172
  %v174 = vpop.f32.mrf.mxu0
  %v175 = vadd.f32 0.0, %v174
  %176 = vdwg.mxu0
  %v177 = vadd.f32 %v104, %v173
  %v178 = vadd.f32 %v106, %v175
  %v179 = vxor.u32 %v177, 2147483648
  %v180 = vxor.u32 %v178, 2147483648
  %v181 = vmul.f32 %v179, 1.442695
  %v182 = vpow.pop %v181
  %v183 = vmul.f32 %v180, 1.442695
  %v184 = vpow.pop %v183
  %v185 = vadd.f32 %v182, 1.0
  %v186 = vadd.f32 %v184, 1.0
  %v187 = vrcp.pop %v185
  %v188 = vmul.f32 %v185, %v187
  %v189 = vsub.f32 1.0, %v188
  %v190 = vmul.f32 %v187, %v189
  %v191 = vadd.f32 %v187, %v190
  %vm192 = vweird.f32 %v185
  %vm193 = vweird.f32 %v187
  %vm194 = vmor %vm192, %vm193
  %v195 = vsel %vm194, %v187, %v191
  %v196 = vand.u32 2147483647, %v185
  %vm197 = vcmp.eq.f32.partialorder %v196, 8.507059e+37
  %v198 = vand.u32 %v185, 2147483648
  %v199 = vor.u32 1.1754944e-38, %v198
  %v200 = vsel %vm197, %v199, %v195
  %v201 = vmul.f32 1.0, %v200
  %v202 = vrcp.pop %v186
  %v203 = vmul.f32 %v186, %v202
  %v204 = vsub.f32 1.0, %v203
  %v205 = vmul.f32 %v202, %v204
  %v206 = vadd.f32 %v202, %v205
  %vm207 = vweird.f32 %v186
  %vm208 = vweird.f32 %v202
  %vm209 = vmor %vm207, %vm208
  %v210 = vsel %vm209, %v202, %v206
  %v211 = vand.u32 2147483647, %v186
  %vm212 = vcmp.eq.f32.partialorder %v211, 8.507059e+37
  %v213 = vand.u32 %v186, 2147483648
  %v214 = vor.u32 1.1754944e-38, %v213
  %v215 = vsel %vm212, %v214, %v210
  %v216 = vmul.f32 1.0, %v215
  %v217 = vtanh.pop %v177
  %v218 = vtanh.pop %v178
  %v219 = vmul.f32 %v201, 0.0
  %v220 = vmul.f32 %v216, 0.0
  %223 = vrot.lane.b32.xlu0 %v217, 32
  %v224 = vpop.permute.xlu0 %223
  %225 = vrot.lane.b32.xlu0 %v218, 32
  %v226 = vpop.permute.xlu0 %225
  %v229 = vmul.f32 %v201, %v224
  %v230 = vmul.f32 %v216, %v226
  %233 = vrot.lane.b32.xlu0 %v229, 32
  %v234 = vpop.permute.xlu0 %233
  %235 = vrot.lane.b32.xlu0 %v230, 32
  %v236 = vpop.permute.xlu0 %235
  %v239 = vadd.f32 %v219, %v234
  %v240 = vadd.f32 %v220, %v236
  %v241 = vtanh.pop %v239
  %v242 = vtanh.pop %v240
  %245 = vrot.lane.b32.xlu0 %v241, 32
  %v246 = vpop.permute.xlu0 %245
  %247 = vrot.lane.b32.xlu0 %v242, 32
  %v248 = vpop.permute.xlu0 %247
  %v251 = vmul.f32 %v201, %v246
  %v252 = vmul.f32 %v216, %v248
  %v253 = vpack.c.bf16 %v252, %v251
  %255 = vrot.lane.b32.xlu0 %v253, 64
  %v256 = vpop.permute.xlu0 %255
  %v258 = vsel %vm159, %v256, 0
  %260 = vmatpush.bf16.msra.mxu0 0
  %261 = vmatpush.bf16.msra.mxu0 0
  %262 = vmatpush.bf16.msra.mxu0 0
  %263 = vmatpush.bf16.msra.mxu0 0
  %264 = vmatpush.bf16.msra.mxu0 0
  %265 = vmatpush.bf16.msra.mxu0 0
  %266 = vmatpush.bf16.msra.mxu0 %v156
  %267 = vmatpush.bf16.msra.mxu0 %v155
  %268 = vmatmul.bf16.gmra.mxu0 %v258
  %v269 = vpop.f32.mrf.mxu0
  %v270 = vadd.f32 0.0, %v269
  %v271 = vpop.f32.mrf.mxu0
  %v272 = vadd.f32 0.0, %v271
  %273 = vdwg.mxu0
  %v274 = vadd.f32 %v109, %v270
  %v275 = vadd.f32 %v111, %v272
  %v276 = vxor.u32 %v274, 2147483648
  %v277 = vxor.u32 %v275, 2147483648
  %v278 = vmul.f32 %v276, 1.442695
  %v279 = vpow.pop %v278
  %v280 = vmul.f32 %v277, 1.442695
  %v281 = vpow.pop %v280
  %v282 = vadd.f32 %v279, 1.0
  %v283 = vadd.f32 %v281, 1.0
  %v284 = vrcp.pop %v282
  %v285 = vmul.f32 %v282, %v284
  %v286 = vsub.f32 1.0, %v285
  %v287 = vmul.f32 %v284, %v286
  %v288 = vadd.f32 %v284, %v287
  %vm289 = vweird.f32 %v282
  %vm290 = vweird.f32 %v284
  %vm291 = vmor %vm289, %vm290
  %v292 = vsel %vm291, %v284, %v288
  %v293 = vand.u32 2147483647, %v282
  %vm294 = vcmp.eq.f32.partialorder %v293, 8.507059e+37
  %v295 = vand.u32 %v282, 2147483648
  %v296 = vor.u32 1.1754944e-38, %v295
  %v297 = vsel %vm294, %v296, %v292
  %v298 = vmul.f32 1.0, %v297
  %v299 = vrcp.pop %v283
  %v300 = vmul.f32 %v283, %v299
  %v301 = vsub.f32 1.0, %v300
  %v302 = vmul.f32 %v299, %v301
  %v303 = vadd.f32 %v299, %v302
  %vm304 = vweird.f32 %v283
  %vm305 = vweird.f32 %v299
  %vm306 = vmor %vm304, %vm305
  %v307 = vsel %vm306, %v299, %v303
  %v308 = vand.u32 2147483647, %v283
  %vm309 = vcmp.eq.f32.partialorder %v308, 8.507059e+37
  %v310 = vand.u32 %v283, 2147483648
  %v311 = vor.u32 1.1754944e-38, %v310
  %v312 = vsel %vm309, %v311, %v307
  %v313 = vmul.f32 1.0, %v312
  %v314 = vtanh.pop %v274
  %v315 = vtanh.pop %v275
  %v316 = vmul.f32 %v298, %v239
  %v317 = vmul.f32 %v313, %v240
  %320 = vrot.lane.b32.xlu0 %v314, 32
  %v321 = vpop.permute.xlu0 %320
  %322 = vrot.lane.b32.xlu0 %v315, 32
  %v323 = vpop.permute.xlu0 %322
  %v326 = vmul.f32 %v298, %v321
  %v327 = vmul.f32 %v313, %v323
  %330 = vrot.lane.b32.xlu0 %v326, 32
  %v331 = vpop.permute.xlu0 %330
  %332 = vrot.lane.b32.xlu0 %v327, 32
  %v333 = vpop.permute.xlu0 %332
  %v336 = vadd.f32 %v316, %v331
  %v337 = vadd.f32 %v317, %v333
  %v338 = vtanh.pop %v336
  %v339 = vtanh.pop %v337
  %342 = vrot.lane.b32.xlu0 %v338, 32
  %v343 = vpop.permute.xlu0 %342
  %344 = vrot.lane.b32.xlu0 %v339, 32
  %v345 = vpop.permute.xlu0 %344
  %v348 = vmul.f32 %v298, %v343
  %v349 = vmul.f32 %v313, %v345
  %v350 = vpack.c.bf16 %v349, %v348
  %352 = vrot.lane.b32.xlu0 %v350, 64
  %v353 = vpop.permute.xlu0 %352
  %v355 = vsel %vm159, %v353, 0
  %357 = vmatpush.bf16.msra.mxu0 0
  %358 = vmatpush.bf16.msra.mxu0 0
  %359 = vmatpush.bf16.msra.mxu0 0
  %360 = vmatpush.bf16.msra.mxu0 0
  %361 = vmatpush.bf16.msra.mxu0 0
  %362 = vmatpush.bf16.msra.mxu0 0
  %363 = vmatpush.bf16.msra.mxu0 %v156
  %364 = vmatpush.bf16.msra.mxu0 %v155
  %365 = vmatmul.bf16.gmra.mxu0 %v355
  %v366 = vpop.f32.mrf.mxu0
  %v367 = vadd.f32 0.0, %v366
  %v368 = vpop.f32.mrf.mxu0
  %v369 = vadd.f32 0.0, %v368
  %370 = vdwg.mxu0
  %v371 = vadd.f32 %v114, %v367
  %v372 = vadd.f32 %v116, %v369
  %v373 = vxor.u32 %v371, 2147483648
  %v374 = vxor.u32 %v372, 2147483648
  %v375 = vmul.f32 %v373, 1.442695
  %v376 = vpow.pop %v375
  %v377 = vmul.f32 %v374, 1.442695
  %v378 = vpow.pop %v377
  %v379 = vadd.f32 %v376, 1.0
  %v380 = vadd.f32 %v378, 1.0
  %v381 = vrcp.pop %v379
  %v382 = vmul.f32 %v379, %v381
  %v383 = vsub.f32 1.0, %v382
  %v384 = vmul.f32 %v381, %v383
  %v385 = vadd.f32 %v381, %v384
  %vm386 = vweird.f32 %v379
  %vm387 = vweird.f32 %v381
  %vm388 = vmor %vm386, %vm387
  %v389 = vsel %vm388, %v381, %v385
  %v390 = vand.u32 2147483647, %v379
  %vm391 = vcmp.eq.f32.partialorder %v390, 8.507059e+37
  %v392 = vand.u32 %v379, 2147483648
  %v393 = vor.u32 1.1754944e-38, %v392
  %v394 = vsel %vm391, %v393, %v389
  %v395 = vmul.f32 1.0, %v394
  %v396 = vrcp.pop %v380
  %v397 = vmul.f32 %v380, %v396
  %v398 = vsub.f32 1.0, %v397
  %v399 = vmul.f32 %v396, %v398
  %v400 = vadd.f32 %v396, %v399
  %vm401 = vweird.f32 %v380
  %vm402 = vweird.f32 %v396
  %vm403 = vmor %vm401, %vm402
  %v404 = vsel %vm403, %v396, %v400
  %v405 = vand.u32 2147483647, %v380
  %vm406 = vcmp.eq.f32.partialorder %v405, 8.507059e+37
  %v407 = vand.u32 %v380, 2147483648
  %v408 = vor.u32 1.1754944e-38, %v407
  %v409 = vsel %vm406, %v408, %v404
  %v410 = vmul.f32 1.0, %v409
  %v411 = vtanh.pop %v371
  %v412 = vtanh.pop %v372
  %v413 = vmul.f32 %v395, %v336
  %v414 = vmul.f32 %v410, %v337
  %417 = vrot.lane.b32.xlu0 %v411, 32
  %v418 = vpop.permute.xlu0 %417
  %419 = vrot.lane.b32.xlu0 %v412, 32
  %v420 = vpop.permute.xlu0 %419
  %v423 = vmul.f32 %v395, %v418
  %v424 = vmul.f32 %v410, %v420
  %427 = vrot.lane.b32.xlu0 %v423, 32
  %v428 = vpop.permute.xlu0 %427
  %429 = vrot.lane.b32.xlu0 %v424, 32
  %v430 = vpop.permute.xlu0 %429
  %v433 = vadd.f32 %v413, %v428
  %v434 = vadd.f32 %v414, %v430
  %v435 = vtanh.pop %v433
  %v436 = vtanh.pop %v434
  %439 = vrot.lane.b32.xlu0 %v435, 32
  %v440 = vpop.permute.xlu0 %439
  %441 = vrot.lane.b32.xlu0 %v436, 32
  %v442 = vpop.permute.xlu0 %441
  %v445 = vmul.f32 %v395, %v440
  %v446 = vmul.f32 %v410, %v442
  %v447 = vpack.c.bf16 %v446, %v445
  %449 = vrot.lane.b32.xlu0 %v447, 64
  %v450 = vpop.permute.xlu0 %449
  %v452 = vsel %vm159, %v450, 0
  %454 = vmatpush.bf16.msra.mxu0 0
  %455 = vmatpush.bf16.msra.mxu0 0
  %456 = vmatpush.bf16.msra.mxu0 0
  %457 = vmatpush.bf16.msra.mxu0 0
  %458 = vmatpush.bf16.msra.mxu0 0
  %459 = vmatpush.bf16.msra.mxu0 0
  %460 = vmatpush.bf16.msra.mxu0 %v156
  %461 = vmatpush.bf16.msra.mxu0 %v155
  %462 = vmatmul.bf16.gmra.mxu0 %v452
  %v463 = vpop.f32.mrf.mxu0
  %v464 = vadd.f32 0.0, %v463
  %v465 = vpop.f32.mrf.mxu0
  %v466 = vadd.f32 0.0, %v465
  %467 = vdwg.mxu0
  %v468 = vadd.f32 %v119, %v464
  %v469 = vadd.f32 %v121, %v466
  %v470 = vxor.u32 %v468, 2147483648
  %v471 = vxor.u32 %v469, 2147483648
  %v472 = vmul.f32 %v470, 1.442695
  %v473 = vpow.pop %v472
  %v474 = vmul.f32 %v471, 1.442695
  %v475 = vpow.pop %v474
  %v476 = vadd.f32 %v473, 1.0
  %v477 = vadd.f32 %v475, 1.0
  %v478 = vrcp.pop %v476
  %v479 = vmul.f32 %v476, %v478
  %v480 = vsub.f32 1.0, %v479
  %v481 = vmul.f32 %v478, %v480
  %v482 = vadd.f32 %v478, %v481
  %vm483 = vweird.f32 %v476
  %vm484 = vweird.f32 %v478
  %vm485 = vmor %vm483, %vm484
  %v486 = vsel %vm485, %v478, %v482
  %v487 = vand.u32 2147483647, %v476
  %vm488 = vcmp.eq.f32.partialorder %v487, 8.507059e+37
  %v489 = vand.u32 %v476, 2147483648
  %v490 = vor.u32 1.1754944e-38, %v489
  %v491 = vsel %vm488, %v490, %v486
  %v492 = vmul.f32 1.0, %v491
  %v493 = vrcp.pop %v477
  %v494 = vmul.f32 %v477, %v493
  %v495 = vsub.f32 1.0, %v494
  %v496 = vmul.f32 %v493, %v495
  %v497 = vadd.f32 %v493, %v496
  %vm498 = vweird.f32 %v477
  %vm499 = vweird.f32 %v493
  %vm500 = vmor %vm498, %vm499
  %v501 = vsel %vm500, %v493, %v497
  %v502 = vand.u32 2147483647, %v477
  %vm503 = vcmp.eq.f32.partialorder %v502, 8.507059e+37
  %v504 = vand.u32 %v477, 2147483648
  %v505 = vor.u32 1.1754944e-38, %v504
  %v506 = vsel %vm503, %v505, %v501
  %v507 = vmul.f32 1.0, %v506
  %v508 = vtanh.pop %v468
  %v509 = vtanh.pop %v469
  %v510 = vmul.f32 %v492, %v433
  %v511 = vmul.f32 %v507, %v434
  %514 = vrot.lane.b32.xlu0 %v508, 32
  %v515 = vpop.permute.xlu0 %514
  %516 = vrot.lane.b32.xlu0 %v509, 32
  %v517 = vpop.permute.xlu0 %516
  %v520 = vmul.f32 %v492, %v515
  %v521 = vmul.f32 %v507, %v517
  %524 = vrot.lane.b32.xlu0 %v520, 32
  %v525 = vpop.permute.xlu0 %524
  %526 = vrot.lane.b32.xlu0 %v521, 32
  %v527 = vpop.permute.xlu0 %526
  %v530 = vadd.f32 %v510, %v525
  %v531 = vadd.f32 %v511, %v527
  %v532 = vtanh.pop %v530
  %v533 = vtanh.pop %v531
  %536 = vrot.lane.b32.xlu0 %v532, 32
  %v537 = vpop.permute.xlu0 %536
  %538 = vrot.lane.b32.xlu0 %v533, 32
  %v539 = vpop.permute.xlu0 %538
  %v542 = vmul.f32 %v492, %v537
  %v543 = vmul.f32 %v507, %v539
  %v544 = vpack.c.bf16 %v543, %v542
  %546 = vrot.lane.b32.xlu0 %v544, 64
  %v547 = vpop.permute.xlu0 %546
  %v549 = vsel %vm159, %v547, 0
  %551 = vmatpush.bf16.msra.mxu0 0
  %552 = vmatpush.bf16.msra.mxu0 0
  %553 = vmatpush.bf16.msra.mxu0 0
  %554 = vmatpush.bf16.msra.mxu0 0
  %555 = vmatpush.bf16.msra.mxu0 0
  %556 = vmatpush.bf16.msra.mxu0 0
  %557 = vmatpush.bf16.msra.mxu0 %v156
  %558 = vmatpush.bf16.msra.mxu0 %v155
  %559 = vmatmul.bf16.gmra.mxu0 %v549
  %v560 = vpop.f32.mrf.mxu0
  %v561 = vadd.f32 0.0, %v560
  %v562 = vpop.f32.mrf.mxu0
  %v563 = vadd.f32 0.0, %v562
  %564 = vdwg.mxu0
  %v565 = vadd.f32 %v124, %v561
  %v566 = vadd.f32 %v126, %v563
  %v567 = vxor.u32 %v565, 2147483648
  %v568 = vxor.u32 %v566, 2147483648
  %v569 = vmul.f32 %v567, 1.442695
  %v570 = vpow.pop %v569
  %v571 = vmul.f32 %v568, 1.442695
  %v572 = vpow.pop %v571
  %v573 = vadd.f32 %v570, 1.0
  %v574 = vadd.f32 %v572, 1.0
  %v575 = vrcp.pop %v573
  %v576 = vmul.f32 %v573, %v575
  %v577 = vsub.f32 1.0, %v576
  %v578 = vmul.f32 %v575, %v577
  %v579 = vadd.f32 %v575, %v578
  %vm580 = vweird.f32 %v573
  %vm581 = vweird.f32 %v575
  %vm582 = vmor %vm580, %vm581
  %v583 = vsel %vm582, %v575, %v579
  %v584 = vand.u32 2147483647, %v573
  %vm585 = vcmp.eq.f32.partialorder %v584, 8.507059e+37
  %v586 = vand.u32 %v573, 2147483648
  %v587 = vor.u32 1.1754944e-38, %v586
  %v588 = vsel %vm585, %v587, %v583
  %v589 = vmul.f32 1.0, %v588
  %v590 = vrcp.pop %v574
  %v591 = vmul.f32 %v574, %v590
  %v592 = vsub.f32 1.0, %v591
  %v593 = vmul.f32 %v590, %v592
  %v594 = vadd.f32 %v590, %v593
  %vm595 = vweird.f32 %v574
  %vm596 = vweird.f32 %v590
  %vm597 = vmor %vm595, %vm596
  %v598 = vsel %vm597, %v590, %v594
  %v599 = vand.u32 2147483647, %v574
  %vm600 = vcmp.eq.f32.partialorder %v599, 8.507059e+37
  %v601 = vand.u32 %v574, 2147483648
  %v602 = vor.u32 1.1754944e-38, %v601
  %v603 = vsel %vm600, %v602, %v598
  %v604 = vmul.f32 1.0, %v603
  %v605 = vtanh.pop %v565
  %v606 = vtanh.pop %v566
  %v607 = vmul.f32 %v589, %v530
  %v608 = vmul.f32 %v604, %v531
  %611 = vrot.lane.b32.xlu0 %v605, 32
  %v612 = vpop.permute.xlu0 %611
  %613 = vrot.lane.b32.xlu0 %v606, 32
  %v614 = vpop.permute.xlu0 %613
  %v617 = vmul.f32 %v589, %v612
  %v618 = vmul.f32 %v604, %v614
  %621 = vrot.lane.b32.xlu0 %v617, 32
  %v622 = vpop.permute.xlu0 %621
  %623 = vrot.lane.b32.xlu0 %v618, 32
  %v624 = vpop.permute.xlu0 %623
  %v627 = vadd.f32 %v607, %v622
  %v628 = vadd.f32 %v608, %v624
  %v629 = vtanh.pop %v627
  %v630 = vtanh.pop %v628
  %633 = vrot.lane.b32.xlu0 %v629, 32
  %v634 = vpop.permute.xlu0 %633
  %635 = vrot.lane.b32.xlu0 %v630, 32
  %v636 = vpop.permute.xlu0 %635
  %v639 = vmul.f32 %v589, %v634
  %v640 = vmul.f32 %v604, %v636
  %v641 = vpack.c.bf16 %v640, %v639
  %643 = vrot.lane.b32.xlu0 %v641, 64
  %v644 = vpop.permute.xlu0 %643
  %v646 = vsel %vm159, %v644, 0
  %648 = vmatpush.bf16.msra.mxu0 0
  %649 = vmatpush.bf16.msra.mxu0 0
  %650 = vmatpush.bf16.msra.mxu0 0
  %651 = vmatpush.bf16.msra.mxu0 0
  %652 = vmatpush.bf16.msra.mxu0 0
  %653 = vmatpush.bf16.msra.mxu0 0
  %654 = vmatpush.bf16.msra.mxu0 %v156
  %655 = vmatpush.bf16.msra.mxu0 %v155
  %656 = vmatmul.bf16.gmra.mxu0 %v646
  %v657 = vpop.f32.mrf.mxu0
  %v658 = vadd.f32 0.0, %v657
  %v659 = vpop.f32.mrf.mxu0
  %v660 = vadd.f32 0.0, %v659
  %661 = vdwg.mxu0
  %v662 = vadd.f32 %v129, %v658
  %v663 = vadd.f32 %v131, %v660
  %v664 = vxor.u32 %v662, 2147483648
  %v665 = vxor.u32 %v663, 2147483648
  %v666 = vmul.f32 %v664, 1.442695
  %v667 = vpow.pop %v666
  %v668 = vmul.f32 %v665, 1.442695
  %v669 = vpow.pop %v668
  %v670 = vadd.f32 %v667, 1.0
  %v671 = vadd.f32 %v669, 1.0
  %v672 = vrcp.pop %v670
  %v673 = vmul.f32 %v670, %v672
  %v674 = vsub.f32 1.0, %v673
  %v675 = vmul.f32 %v672, %v674
  %v676 = vadd.f32 %v672, %v675
  %vm677 = vweird.f32 %v670
  %vm678 = vweird.f32 %v672
  %vm679 = vmor %vm677, %vm678
  %v680 = vsel %vm679, %v672, %v676
  %v681 = vand.u32 2147483647, %v670
  %vm682 = vcmp.eq.f32.partialorder %v681, 8.507059e+37
  %v683 = vand.u32 %v670, 2147483648
  %v684 = vor.u32 1.1754944e-38, %v683
  %v685 = vsel %vm682, %v684, %v680
  %v686 = vmul.f32 1.0, %v685
  %v687 = vrcp.pop %v671
  %v688 = vmul.f32 %v671, %v687
  %v689 = vsub.f32 1.0, %v688
  %v690 = vmul.f32 %v687, %v689
  %v691 = vadd.f32 %v687, %v690
  %vm692 = vweird.f32 %v671
  %vm693 = vweird.f32 %v687
  %vm694 = vmor %vm692, %vm693
  %v695 = vsel %vm694, %v687, %v691
  %v696 = vand.u32 2147483647, %v671
  %vm697 = vcmp.eq.f32.partialorder %v696, 8.507059e+37
  %v698 = vand.u32 %v671, 2147483648
  %v699 = vor.u32 1.1754944e-38, %v698
  %v700 = vsel %vm697, %v699, %v695
  %v701 = vmul.f32 1.0, %v700
  %v702 = vtanh.pop %v662
  %v703 = vtanh.pop %v663
  %v704 = vmul.f32 %v686, %v627
  %v705 = vmul.f32 %v701, %v628
  %708 = vrot.lane.b32.xlu0 %v702, 32
  %v709 = vpop.permute.xlu0 %708
  %710 = vrot.lane.b32.xlu0 %v703, 32
  %v711 = vpop.permute.xlu0 %710
  %v714 = vmul.f32 %v686, %v709
  %v715 = vmul.f32 %v701, %v711
  %718 = vrot.lane.b32.xlu0 %v714, 32
  %v719 = vpop.permute.xlu0 %718
  %720 = vrot.lane.b32.xlu0 %v715, 32
  %v721 = vpop.permute.xlu0 %720
  %v724 = vadd.f32 %v704, %v719
  %v725 = vadd.f32 %v705, %v721
  %v726 = vtanh.pop %v724
  %v727 = vtanh.pop %v725
  %730 = vrot.lane.b32.xlu0 %v726, 32
  %v731 = vpop.permute.xlu0 %730
  %732 = vrot.lane.b32.xlu0 %v727, 32
  %v733 = vpop.permute.xlu0 %732
  %v736 = vmul.f32 %v686, %v731
  %v737 = vmul.f32 %v701, %v733
  %v738 = vpack.c.bf16 %v737, %v736
  %740 = vrot.lane.b32.xlu0 %v738, 64
  %v741 = vpop.permute.xlu0 %740
  %v743 = vsel %vm159, %v741, 0
  %745 = vmatpush.bf16.msra.mxu0 0
  %746 = vmatpush.bf16.msra.mxu0 0
  %747 = vmatpush.bf16.msra.mxu0 0
  %748 = vmatpush.bf16.msra.mxu0 0
  %749 = vmatpush.bf16.msra.mxu0 0
  %750 = vmatpush.bf16.msra.mxu0 0
  %751 = vmatpush.bf16.msra.mxu0 %v156
  %752 = vmatpush.bf16.msra.mxu0 %v155
  %753 = vmatmul.bf16.gmra.mxu0 %v743
  %v754 = vpop.f32.mrf.mxu0
  %v755 = vadd.f32 0.0, %v754
  %v756 = vpop.f32.mrf.mxu0
  %v757 = vadd.f32 0.0, %v756
  %758 = vdwg.mxu0
  %v759 = vadd.f32 %v134, %v755
  %v760 = vadd.f32 %v136, %v757
  %v761 = vxor.u32 %v759, 2147483648
  %v762 = vxor.u32 %v760, 2147483648
  %v763 = vmul.f32 %v761, 1.442695
  %v764 = vpow.pop %v763
  %v765 = vmul.f32 %v762, 1.442695
  %v766 = vpow.pop %v765
  %v767 = vadd.f32 %v764, 1.0
  %v768 = vadd.f32 %v766, 1.0
  %v769 = vrcp.pop %v767
  %v770 = vmul.f32 %v767, %v769
  %v771 = vsub.f32 1.0, %v770
  %v772 = vmul.f32 %v769, %v771
  %v773 = vadd.f32 %v769, %v772
  %vm774 = vweird.f32 %v767
  %vm775 = vweird.f32 %v769
  %vm776 = vmor %vm774, %vm775
  %v777 = vsel %vm776, %v769, %v773
  %v778 = vand.u32 2147483647, %v767
  %vm779 = vcmp.eq.f32.partialorder %v778, 8.507059e+37
  %v780 = vand.u32 %v767, 2147483648
  %v781 = vor.u32 1.1754944e-38, %v780
  %v782 = vsel %vm779, %v781, %v777
  %v783 = vmul.f32 1.0, %v782
  %v784 = vrcp.pop %v768
  %v785 = vmul.f32 %v768, %v784
  %v786 = vsub.f32 1.0, %v785
  %v787 = vmul.f32 %v784, %v786
  %v788 = vadd.f32 %v784, %v787
  %vm789 = vweird.f32 %v768
  %vm790 = vweird.f32 %v784
  %vm791 = vmor %vm789, %vm790
  %v792 = vsel %vm791, %v784, %v788
  %v793 = vand.u32 2147483647, %v768
  %vm794 = vcmp.eq.f32.partialorder %v793, 8.507059e+37
  %v795 = vand.u32 %v768, 2147483648
  %v796 = vor.u32 1.1754944e-38, %v795
  %v797 = vsel %vm794, %v796, %v792
  %v798 = vmul.f32 1.0, %v797
  %v799 = vtanh.pop %v759
  %v800 = vtanh.pop %v760
  %v801 = vmul.f32 %v783, %v724
  %v802 = vmul.f32 %v798, %v725
  %805 = vrot.lane.b32.xlu0 %v799, 32
  %v806 = vpop.permute.xlu0 %805
  %807 = vrot.lane.b32.xlu0 %v800, 32
  %v808 = vpop.permute.xlu0 %807
  %v811 = vmul.f32 %v783, %v806
  %v812 = vmul.f32 %v798, %v808
  %815 = vrot.lane.b32.xlu0 %v811, 32
  %v816 = vpop.permute.xlu0 %815
  %817 = vrot.lane.b32.xlu0 %v812, 32
  %v818 = vpop.permute.xlu0 %817
  %v821 = vadd.f32 %v801, %v816
  %v822 = vadd.f32 %v802, %v818
  %v823 = vtanh.pop %v821
  %v824 = vtanh.pop %v822
  %827 = vrot.lane.b32.xlu0 %v823, 32
  %v828 = vpop.permute.xlu0 %827
  %829 = vrot.lane.b32.xlu0 %v824, 32
  %v830 = vpop.permute.xlu0 %829
  %v833 = vmul.f32 %v783, %v828
  %v834 = vmul.f32 %v798, %v830
  %v835 = vpack.c.bf16 %v834, %v833
  %837 = vrot.lane.b32.xlu0 %v835, 64
  %v838 = vpop.permute.xlu0 %837
  %v840 = vsel %vm159, %v838, 0
  %842 = vmatpush.bf16.msra.mxu0 0
  %843 = vmatpush.bf16.msra.mxu0 0
  %844 = vmatpush.bf16.msra.mxu0 0
  %845 = vmatpush.bf16.msra.mxu0 0
  %846 = vmatpush.bf16.msra.mxu0 0
  %847 = vmatpush.bf16.msra.mxu0 0
  %848 = vmatpush.bf16.msra.mxu0 %v156
  %849 = vmatpush.bf16.msra.mxu0 %v155
  %850 = vmatmul.bf16.gmra.mxu0 %v840
  %v851 = vpop.f32.mrf.mxu0
  %v852 = vadd.f32 0.0, %v851
  %v853 = vpop.f32.mrf.mxu0
  %v854 = vadd.f32 0.0, %v853
  %855 = vdwg.mxu0
  %v856 = vadd.f32 %v139, %v852
  %v857 = vadd.f32 %v141, %v854
  %v858 = vxor.u32 %v856, 2147483648
  %v859 = vxor.u32 %v857, 2147483648
  %v860 = vmul.f32 %v858, 1.442695
  %v861 = vpow.pop %v860
  %v862 = vmul.f32 %v859, 1.442695
  %v863 = vpow.pop %v862
  %v864 = vadd.f32 %v861, 1.0
  %v865 = vadd.f32 %v863, 1.0
  %v866 = vrcp.pop %v864
  %v867 = vmul.f32 %v864, %v866
  %v868 = vsub.f32 1.0, %v867
  %v869 = vmul.f32 %v866, %v868
  %v870 = vadd.f32 %v866, %v869
  %vm871 = vweird.f32 %v864
  %vm872 = vweird.f32 %v866
  %vm873 = vmor %vm871, %vm872
  %v874 = vsel %vm873, %v866, %v870
  %v875 = vand.u32 2147483647, %v864
  %vm876 = vcmp.eq.f32.partialorder %v875, 8.507059e+37
  %v877 = vand.u32 %v864, 2147483648
  %v878 = vor.u32 1.1754944e-38, %v877
  %v879 = vsel %vm876, %v878, %v874
  %v880 = vmul.f32 1.0, %v879
  %v881 = vrcp.pop %v865
  %v882 = vmul.f32 %v865, %v881
  %v883 = vsub.f32 1.0, %v882
  %v884 = vmul.f32 %v881, %v883
  %v885 = vadd.f32 %v881, %v884
  %vm886 = vweird.f32 %v865
  %vm887 = vweird.f32 %v881
  %vm888 = vmor %vm886, %vm887
  %v889 = vsel %vm888, %v881, %v885
  %v890 = vand.u32 2147483647, %v865
  %vm891 = vcmp.eq.f32.partialorder %v890, 8.507059e+37
  %v892 = vand.u32 %v865, 2147483648
  %v893 = vor.u32 1.1754944e-38, %v892
  %v894 = vsel %vm891, %v893, %v889
  %v895 = vmul.f32 1.0, %v894
  %v896 = vtanh.pop %v856
  %v897 = vtanh.pop %v857
  %v898 = vmul.f32 %v880, %v821
  %v899 = vmul.f32 %v895, %v822
  %902 = vrot.lane.b32.xlu0 %v896, 32
  %v903 = vpop.permute.xlu0 %902
  %904 = vrot.lane.b32.xlu0 %v897, 32
  %v905 = vpop.permute.xlu0 %904
  %v908 = vmul.f32 %v880, %v903
  %v909 = vmul.f32 %v895, %v905
  %912 = vrot.lane.b32.xlu0 %v908, 32
  %v913 = vpop.permute.xlu0 %912
  %914 = vrot.lane.b32.xlu0 %v909, 32
  %v915 = vpop.permute.xlu0 %914
  %v918 = vadd.f32 %v898, %v913
  %v919 = vadd.f32 %v899, %v915
  %v920 = vtanh.pop %v918
  %v921 = vtanh.pop %v919
  %924 = vrot.lane.b32.xlu0 %v920, 32
  %v925 = vpop.permute.xlu0 %924
  %926 = vrot.lane.b32.xlu0 %v921, 32
  %v927 = vpop.permute.xlu0 %926
  %v930 = vmul.f32 %v880, %v925
  %v931 = vmul.f32 %v895, %v927
  %v932 = vpack.c.bf16 %v931, %v930
  %v933 = vld [vmem:[%s4] sm:$0xf]
  %v934 = vld [vmem:[%s4 + $0x4] sm:$0xf]
  %v935 = vld [vmem:[%s4 + $0x8] sm:$0xf]
  %v936 = vld [vmem:[%s4 + $0xc] sm:$0xf]
  %v937 = vld [vmem:[%s6] sm:$0x1]
  %v939 = vperm.slane %v937, 0
  %942 = vrot.lane.b32.xlu0 %v932, 64
  %v943 = vpop.permute.xlu0 %942
  %v948 = vunpack.c.l.b16 %v933
  %v949 = vunpack.c.l.b16 %v934
  %v950 = vunpack.c.l.b16 %v935
  %v951 = vunpack.c.l.b16 %v936
  %v952 = vpack.c.b16 %v949, %v948
  %v953 = vpack.c.b16 %v951, %v950
  %v957 = vsel %vm159, %v943, 0
  %959 = vmatpush.bf16.msra.mxu0 0
  %960 = vmatpush.bf16.msra.mxu0 0
  %961 = vmatpush.bf16.msra.mxu0 0
  %962 = vmatpush.bf16.msra.mxu0 0
  %963 = vmatpush.bf16.msra.mxu0 0
  %964 = vmatpush.bf16.msra.mxu0 0
  %965 = vmatpush.bf16.msra.mxu0 %v953
  %966 = vmatpush.bf16.msra.mxu0 %v952
  %967 = vmatmul.bf16.gmra.mxu0 %v258
  %v968 = vpop.f32.mrf.mxu0
  %v969 = vadd.f32 %v939, %v968
  %v970 = vpop.f32.mrf.mxu0
  %v971 = vadd.f32 %v939, %v970
  %972 = vmatmul.bf16.gmra.mxu0 %v355
  %v973 = vpop.f32.mrf.mxu0
  %v974 = vadd.f32 %v939, %v973
  %v975 = vpop.f32.mrf.mxu0
  %v976 = vadd.f32 %v939, %v975
  %977 = vmatmul.bf16.gmra.mxu0 %v452
  %v978 = vpop.f32.mrf.mxu0
  %v979 = vadd.f32 %v939, %v978
  %v980 = vpop.f32.mrf.mxu0
  %v981 = vadd.f32 %v939, %v980
  %982 = vmatmul.bf16.gmra.mxu0 %v549
  %v983 = vpop.f32.mrf.mxu0
  %v984 = vadd.f32 %v939, %v983
  %v985 = vpop.f32.mrf.mxu0
  %v986 = vadd.f32 %v939, %v985
  %987 = vmatmul.bf16.gmra.mxu0 %v646
  %v988 = vpop.f32.mrf.mxu0
  %v989 = vadd.f32 %v939, %v988
  %v990 = vpop.f32.mrf.mxu0
  %v991 = vadd.f32 %v939, %v990
  %992 = vmatmul.bf16.gmra.mxu0 %v743
  %v993 = vpop.f32.mrf.mxu0
  %v994 = vadd.f32 %v939, %v993
  %v995 = vpop.f32.mrf.mxu0
  %v996 = vadd.f32 %v939, %v995
  %997 = vmatmul.bf16.gmra.mxu0 %v840
  %v998 = vpop.f32.mrf.mxu0
  %v999 = vadd.f32 %v939, %v998
  %v1000 = vpop.f32.mrf.mxu0
  %v1001 = vadd.f32 %v939, %v1000
  %1002 = vmatmul.bf16.gmra.mxu0 %v957
  %v1003 = vpop.f32.mrf.mxu0
  %v1004 = vadd.f32 %v939, %v1003
  %v1005 = vpop.f32.mrf.mxu0
  %v1006 = vadd.f32 %v939, %v1005
  %1007 = vdwg.mxu0
  %v1008 = vld [vmem:[%s5] sm:$0xf]
  %v1009 = vld [vmem:[%s5 + $0x4] sm:$0xf]
  %v1010 = vld [vmem:[%s5 + $0x8] sm:$0xf]
  %v1011 = vld [vmem:[%s5 + $0xc] sm:$0xf]
  %v1016 = vunpack.c.l.b16 %v1008
  %v1017 = vunpack.c.l.b16 %v1009
  %v1018 = vunpack.c.l.b16 %v1010
  %v1019 = vunpack.c.l.b16 %v1011
  %v1020 = vpack.c.b16 %v1017, %v1016
  %v1021 = vpack.c.b16 %v1019, %v1018
  %1024 = vmatpush.bf16.msra.mxu0 0
  %1025 = vmatpush.bf16.msra.mxu0 0
  %1026 = vmatpush.bf16.msra.mxu0 0
  %1027 = vmatpush.bf16.msra.mxu0 0
  %1028 = vmatpush.bf16.msra.mxu0 0
  %1029 = vmatpush.bf16.msra.mxu0 0
  %1030 = vmatpush.bf16.msra.mxu0 %v1021
  %1031 = vmatpush.bf16.msra.mxu0 %v1020
  %1032 = vmatmul.bf16.gmra.mxu0 %v161
  %v1033 = vpop.f32.mrf.mxu0
  %v1034 = vadd.f32 0.0, %v1033
  %v1035 = vpop.f32.mrf.mxu0
  %v1036 = vadd.f32 0.0, %v1035
  %1037 = vdwg.mxu0
  %v1038 = vadd.f32 %v969, %v1034
  %v1039 = vadd.f32 %v971, %v1036
  %v1040 = vxor.u32 %v1038, 2147483648
  %v1041 = vxor.u32 %v1039, 2147483648
  %v1042 = vmul.f32 %v1040, 1.442695
  %v1043 = vpow.pop %v1042
  %v1044 = vmul.f32 %v1041, 1.442695
  %v1045 = vpow.pop %v1044
  %v1046 = vadd.f32 %v1043, 1.0
  %v1047 = vadd.f32 %v1045, 1.0
  %v1048 = vrcp.pop %v1046
  %v1049 = vmul.f32 %v1046, %v1048
  %v1050 = vsub.f32 1.0, %v1049
  %v1051 = vmul.f32 %v1048, %v1050
  %v1052 = vadd.f32 %v1048, %v1051
  %vm1053 = vweird.f32 %v1046
  %vm1054 = vweird.f32 %v1048
  %vm1055 = vmor %vm1053, %vm1054
  %v1056 = vsel %vm1055, %v1048, %v1052
  %v1057 = vand.u32 2147483647, %v1046
  %vm1058 = vcmp.eq.f32.partialorder %v1057, 8.507059e+37
  %v1059 = vand.u32 %v1046, 2147483648
  %v1060 = vor.u32 1.1754944e-38, %v1059
  %v1061 = vsel %vm1058, %v1060, %v1056
  %v1062 = vmul.f32 1.0, %v1061
  %v1063 = vrcp.pop %v1047
  %v1064 = vmul.f32 %v1047, %v1063
  %v1065 = vsub.f32 1.0, %v1064
  %v1066 = vmul.f32 %v1063, %v1065
  %v1067 = vadd.f32 %v1063, %v1066
  %vm1068 = vweird.f32 %v1047
  %vm1069 = vweird.f32 %v1063
  %vm1070 = vmor %vm1068, %vm1069
  %v1071 = vsel %vm1070, %v1063, %v1067
  %v1072 = vand.u32 2147483647, %v1047
  %vm1073 = vcmp.eq.f32.partialorder %v1072, 8.507059e+37
  %v1074 = vand.u32 %v1047, 2147483648
  %v1075 = vor.u32 1.1754944e-38, %v1074
  %v1076 = vsel %vm1073, %v1075, %v1071
  %v1077 = vmul.f32 1.0, %v1076
  %v1078 = vtanh.pop %v1038
  %v1079 = vtanh.pop %v1039
  %v1080 = vmul.f32 %v1062, 0.0
  %v1081 = vmul.f32 %v1077, 0.0
  %1084 = vrot.lane.b32.xlu0 %v1078, 32
  %v1085 = vpop.permute.xlu0 %1084
  %1086 = vrot.lane.b32.xlu0 %v1079, 32
  %v1087 = vpop.permute.xlu0 %1086
  %v1090 = vmul.f32 %v1062, %v1085
  %v1091 = vmul.f32 %v1077, %v1087
  %1094 = vrot.lane.b32.xlu0 %v1090, 32
  %v1095 = vpop.permute.xlu0 %1094
  %1096 = vrot.lane.b32.xlu0 %v1091, 32
  %v1097 = vpop.permute.xlu0 %1096
  %v1100 = vadd.f32 %v1080, %v1095
  %v1101 = vadd.f32 %v1081, %v1097
  %v1102 = vtanh.pop %v1100
  %v1103 = vtanh.pop %v1101
  %1106 = vrot.lane.b32.xlu0 %v1102, 32
  %v1107 = vpop.permute.xlu0 %1106
  %1108 = vrot.lane.b32.xlu0 %v1103, 32
  %v1109 = vpop.permute.xlu0 %1108
  %v1112 = vmul.f32 %v1062, %v1107
  %v1113 = vmul.f32 %v1077, %v1109
  %v1114 = vpack.c.bf16 %v1113, %v1112
  %1116 = vrot.lane.b32.xlu0 %v1114, 64
  %v1117 = vpop.permute.xlu0 %1116
  %v1119 = vsel %vm159, %v1117, 0
  %1121 = vmatpush.bf16.msra.mxu0 0
  %1122 = vmatpush.bf16.msra.mxu0 0
  %1123 = vmatpush.bf16.msra.mxu0 0
  %1124 = vmatpush.bf16.msra.mxu0 0
  %1125 = vmatpush.bf16.msra.mxu0 0
  %1126 = vmatpush.bf16.msra.mxu0 0
  %1127 = vmatpush.bf16.msra.mxu0 %v1021
  %1128 = vmatpush.bf16.msra.mxu0 %v1020
  %1129 = vmatmul.bf16.gmra.mxu0 %v1119
  %v1130 = vpop.f32.mrf.mxu0
  %v1131 = vadd.f32 0.0, %v1130
  %v1132 = vpop.f32.mrf.mxu0
  %v1133 = vadd.f32 0.0, %v1132
  %1134 = vdwg.mxu0
  %v1135 = vadd.f32 %v974, %v1131
  %v1136 = vadd.f32 %v976, %v1133
  %v1137 = vxor.u32 %v1135, 2147483648
  %v1138 = vxor.u32 %v1136, 2147483648
  %v1139 = vmul.f32 %v1137, 1.442695
  %v1140 = vpow.pop %v1139
  %v1141 = vmul.f32 %v1138, 1.442695
  %v1142 = vpow.pop %v1141
  %v1143 = vadd.f32 %v1140, 1.0
  %v1144 = vadd.f32 %v1142, 1.0
  %v1145 = vrcp.pop %v1143
  %v1146 = vmul.f32 %v1143, %v1145
  %v1147 = vsub.f32 1.0, %v1146
  %v1148 = vmul.f32 %v1145, %v1147
  %v1149 = vadd.f32 %v1145, %v1148
  %vm1150 = vweird.f32 %v1143
  %vm1151 = vweird.f32 %v1145
  %vm1152 = vmor %vm1150, %vm1151
  %v1153 = vsel %vm1152, %v1145, %v1149
  %v1154 = vand.u32 2147483647, %v1143
  %vm1155 = vcmp.eq.f32.partialorder %v1154, 8.507059e+37
  %v1156 = vand.u32 %v1143, 2147483648
  %v1157 = vor.u32 1.1754944e-38, %v1156
  %v1158 = vsel %vm1155, %v1157, %v1153
  %v1159 = vmul.f32 1.0, %v1158
  %v1160 = vrcp.pop %v1144
  %v1161 = vmul.f32 %v1144, %v1160
  %v1162 = vsub.f32 1.0, %v1161
  %v1163 = vmul.f32 %v1160, %v1162
  %v1164 = vadd.f32 %v1160, %v1163
  %vm1165 = vweird.f32 %v1144
  %vm1166 = vweird.f32 %v1160
  %vm1167 = vmor %vm1165, %vm1166
  %v1168 = vsel %vm1167, %v1160, %v1164
  %v1169 = vand.u32 2147483647, %v1144
  %vm1170 = vcmp.eq.f32.partialorder %v1169, 8.507059e+37
  %v1171 = vand.u32 %v1144, 2147483648
  %v1172 = vor.u32 1.1754944e-38, %v1171
  %v1173 = vsel %vm1170, %v1172, %v1168
  %v1174 = vmul.f32 1.0, %v1173
  %v1175 = vtanh.pop %v1135
  %v1176 = vtanh.pop %v1136
  %v1177 = vmul.f32 %v1159, %v1100
  %v1178 = vmul.f32 %v1174, %v1101
  %1181 = vrot.lane.b32.xlu0 %v1175, 32
  %v1182 = vpop.permute.xlu0 %1181
  %1183 = vrot.lane.b32.xlu0 %v1176, 32
  %v1184 = vpop.permute.xlu0 %1183
  %v1187 = vmul.f32 %v1159, %v1182
  %v1188 = vmul.f32 %v1174, %v1184
  %1191 = vrot.lane.b32.xlu0 %v1187, 32
  %v1192 = vpop.permute.xlu0 %1191
  %1193 = vrot.lane.b32.xlu0 %v1188, 32
  %v1194 = vpop.permute.xlu0 %1193
  %v1197 = vadd.f32 %v1177, %v1192
  %v1198 = vadd.f32 %v1178, %v1194
  %v1199 = vtanh.pop %v1197
  %v1200 = vtanh.pop %v1198
  %1203 = vrot.lane.b32.xlu0 %v1199, 32
  %v1204 = vpop.permute.xlu0 %1203
  %1205 = vrot.lane.b32.xlu0 %v1200, 32
  %v1206 = vpop.permute.xlu0 %1205
  %v1209 = vmul.f32 %v1159, %v1204
  %v1210 = vmul.f32 %v1174, %v1206
  %v1211 = vpack.c.bf16 %v1210, %v1209
  %1213 = vrot.lane.b32.xlu0 %v1211, 64
  %v1214 = vpop.permute.xlu0 %1213
  %v1216 = vsel %vm159, %v1214, 0
  %1218 = vmatpush.bf16.msra.mxu0 0
  %1219 = vmatpush.bf16.msra.mxu0 0
  %1220 = vmatpush.bf16.msra.mxu0 0
  %1221 = vmatpush.bf16.msra.mxu0 0
  %1222 = vmatpush.bf16.msra.mxu0 0
  %1223 = vmatpush.bf16.msra.mxu0 0
  %1224 = vmatpush.bf16.msra.mxu0 %v1021
  %1225 = vmatpush.bf16.msra.mxu0 %v1020
  %1226 = vmatmul.bf16.gmra.mxu0 %v1216
  %v1227 = vpop.f32.mrf.mxu0
  %v1228 = vadd.f32 0.0, %v1227
  %v1229 = vpop.f32.mrf.mxu0
  %v1230 = vadd.f32 0.0, %v1229
  %1231 = vdwg.mxu0
  %v1232 = vadd.f32 %v979, %v1228
  %v1233 = vadd.f32 %v981, %v1230
  %v1234 = vxor.u32 %v1232, 2147483648
  %v1235 = vxor.u32 %v1233, 2147483648
  %v1236 = vmul.f32 %v1234, 1.442695
  %v1237 = vpow.pop %v1236
  %v1238 = vmul.f32 %v1235, 1.442695
  %v1239 = vpow.pop %v1238
  %v1240 = vadd.f32 %v1237, 1.0
  %v1241 = vadd.f32 %v1239, 1.0
  %v1242 = vrcp.pop %v1240
  %v1243 = vmul.f32 %v1240, %v1242
  %v1244 = vsub.f32 1.0, %v1243
  %v1245 = vmul.f32 %v1242, %v1244
  %v1246 = vadd.f32 %v1242, %v1245
  %vm1247 = vweird.f32 %v1240
  %vm1248 = vweird.f32 %v1242
  %vm1249 = vmor %vm1247, %vm1248
  %v1250 = vsel %vm1249, %v1242, %v1246
  %v1251 = vand.u32 2147483647, %v1240
  %vm1252 = vcmp.eq.f32.partialorder %v1251, 8.507059e+37
  %v1253 = vand.u32 %v1240, 2147483648
  %v1254 = vor.u32 1.1754944e-38, %v1253
  %v1255 = vsel %vm1252, %v1254, %v1250
  %v1256 = vmul.f32 1.0, %v1255
  %v1257 = vrcp.pop %v1241
  %v1258 = vmul.f32 %v1241, %v1257
  %v1259 = vsub.f32 1.0, %v1258
  %v1260 = vmul.f32 %v1257, %v1259
  %v1261 = vadd.f32 %v1257, %v1260
  %vm1262 = vweird.f32 %v1241
  %vm1263 = vweird.f32 %v1257
  %vm1264 = vmor %vm1262, %vm1263
  %v1265 = vsel %vm1264, %v1257, %v1261
  %v1266 = vand.u32 2147483647, %v1241
  %vm1267 = vcmp.eq.f32.partialorder %v1266, 8.507059e+37
  %v1268 = vand.u32 %v1241, 2147483648
  %v1269 = vor.u32 1.1754944e-38, %v1268
  %v1270 = vsel %vm1267, %v1269, %v1265
  %v1271 = vmul.f32 1.0, %v1270
  %v1272 = vtanh.pop %v1232
  %v1273 = vtanh.pop %v1233
  %v1274 = vmul.f32 %v1256, %v1197
  %v1275 = vmul.f32 %v1271, %v1198
  %1278 = vrot.lane.b32.xlu0 %v1272, 32
  %v1279 = vpop.permute.xlu0 %1278
  %1280 = vrot.lane.b32.xlu0 %v1273, 32
  %v1281 = vpop.permute.xlu0 %1280
  %v1284 = vmul.f32 %v1256, %v1279
  %v1285 = vmul.f32 %v1271, %v1281
  %1288 = vrot.lane.b32.xlu0 %v1284, 32
  %v1289 = vpop.permute.xlu0 %1288
  %1290 = vrot.lane.b32.xlu0 %v1285, 32
  %v1291 = vpop.permute.xlu0 %1290
  %v1294 = vadd.f32 %v1274, %v1289
  %v1295 = vadd.f32 %v1275, %v1291
  %v1296 = vtanh.pop %v1294
  %v1297 = vtanh.pop %v1295
  %1300 = vrot.lane.b32.xlu0 %v1296, 32
  %v1301 = vpop.permute.xlu0 %1300
  %1302 = vrot.lane.b32.xlu0 %v1297, 32
  %v1303 = vpop.permute.xlu0 %1302
  %v1306 = vmul.f32 %v1256, %v1301
  %v1307 = vmul.f32 %v1271, %v1303
  %v1308 = vpack.c.bf16 %v1307, %v1306
  %1310 = vrot.lane.b32.xlu0 %v1308, 64
  %v1311 = vpop.permute.xlu0 %1310
  %v1313 = vsel %vm159, %v1311, 0
  %1315 = vmatpush.bf16.msra.mxu0 0
  %1316 = vmatpush.bf16.msra.mxu0 0
  %1317 = vmatpush.bf16.msra.mxu0 0
  %1318 = vmatpush.bf16.msra.mxu0 0
  %1319 = vmatpush.bf16.msra.mxu0 0
  %1320 = vmatpush.bf16.msra.mxu0 0
  %1321 = vmatpush.bf16.msra.mxu0 %v1021
  %1322 = vmatpush.bf16.msra.mxu0 %v1020
  %1323 = vmatmul.bf16.gmra.mxu0 %v1313
  %v1324 = vpop.f32.mrf.mxu0
  %v1325 = vadd.f32 0.0, %v1324
  %v1326 = vpop.f32.mrf.mxu0
  %v1327 = vadd.f32 0.0, %v1326
  %1328 = vdwg.mxu0
  %v1329 = vadd.f32 %v984, %v1325
  %v1330 = vadd.f32 %v986, %v1327
  %v1331 = vxor.u32 %v1329, 2147483648
  %v1332 = vxor.u32 %v1330, 2147483648
  %v1333 = vmul.f32 %v1331, 1.442695
  %v1334 = vpow.pop %v1333
  %v1335 = vmul.f32 %v1332, 1.442695
  %v1336 = vpow.pop %v1335
  %v1337 = vadd.f32 %v1334, 1.0
  %v1338 = vadd.f32 %v1336, 1.0
  %v1339 = vrcp.pop %v1337
  %v1340 = vmul.f32 %v1337, %v1339
  %v1341 = vsub.f32 1.0, %v1340
  %v1342 = vmul.f32 %v1339, %v1341
  %v1343 = vadd.f32 %v1339, %v1342
  %vm1344 = vweird.f32 %v1337
  %vm1345 = vweird.f32 %v1339
  %vm1346 = vmor %vm1344, %vm1345
  %v1347 = vsel %vm1346, %v1339, %v1343
  %v1348 = vand.u32 2147483647, %v1337
  %vm1349 = vcmp.eq.f32.partialorder %v1348, 8.507059e+37
  %v1350 = vand.u32 %v1337, 2147483648
  %v1351 = vor.u32 1.1754944e-38, %v1350
  %v1352 = vsel %vm1349, %v1351, %v1347
  %v1353 = vmul.f32 1.0, %v1352
  %v1354 = vrcp.pop %v1338
  %v1355 = vmul.f32 %v1338, %v1354
  %v1356 = vsub.f32 1.0, %v1355
  %v1357 = vmul.f32 %v1354, %v1356
  %v1358 = vadd.f32 %v1354, %v1357
  %vm1359 = vweird.f32 %v1338
  %vm1360 = vweird.f32 %v1354
  %vm1361 = vmor %vm1359, %vm1360
  %v1362 = vsel %vm1361, %v1354, %v1358
  %v1363 = vand.u32 2147483647, %v1338
  %vm1364 = vcmp.eq.f32.partialorder %v1363, 8.507059e+37
  %v1365 = vand.u32 %v1338, 2147483648
  %v1366 = vor.u32 1.1754944e-38, %v1365
  %v1367 = vsel %vm1364, %v1366, %v1362
  %v1368 = vmul.f32 1.0, %v1367
  %v1369 = vtanh.pop %v1329
  %v1370 = vtanh.pop %v1330
  %v1371 = vmul.f32 %v1353, %v1294
  %v1372 = vmul.f32 %v1368, %v1295
  %1375 = vrot.lane.b32.xlu0 %v1369, 32
  %v1376 = vpop.permute.xlu0 %1375
  %1377 = vrot.lane.b32.xlu0 %v1370, 32
  %v1378 = vpop.permute.xlu0 %1377
  %v1381 = vmul.f32 %v1353, %v1376
  %v1382 = vmul.f32 %v1368, %v1378
  %1385 = vrot.lane.b32.xlu0 %v1381, 32
  %v1386 = vpop.permute.xlu0 %1385
  %1387 = vrot.lane.b32.xlu0 %v1382, 32
  %v1388 = vpop.permute.xlu0 %1387
  %v1391 = vadd.f32 %v1371, %v1386
  %v1392 = vadd.f32 %v1372, %v1388
  %v1393 = vtanh.pop %v1391
  %v1394 = vtanh.pop %v1392
  %1397 = vrot.lane.b32.xlu0 %v1393, 32
  %v1398 = vpop.permute.xlu0 %1397
  %1399 = vrot.lane.b32.xlu0 %v1394, 32
  %v1400 = vpop.permute.xlu0 %1399
  %v1403 = vmul.f32 %v1353, %v1398
  %v1404 = vmul.f32 %v1368, %v1400
  %v1405 = vpack.c.bf16 %v1404, %v1403
  %1407 = vrot.lane.b32.xlu0 %v1405, 64
  %v1408 = vpop.permute.xlu0 %1407
  %v1410 = vsel %vm159, %v1408, 0
  %1412 = vmatpush.bf16.msra.mxu0 0
  %1413 = vmatpush.bf16.msra.mxu0 0
  %1414 = vmatpush.bf16.msra.mxu0 0
  %1415 = vmatpush.bf16.msra.mxu0 0
  %1416 = vmatpush.bf16.msra.mxu0 0
  %1417 = vmatpush.bf16.msra.mxu0 0
  %1418 = vmatpush.bf16.msra.mxu0 %v1021
  %1419 = vmatpush.bf16.msra.mxu0 %v1020
  %1420 = vmatmul.bf16.gmra.mxu0 %v1410
  %v1421 = vpop.f32.mrf.mxu0
  %v1422 = vadd.f32 0.0, %v1421
  %v1423 = vpop.f32.mrf.mxu0
  %v1424 = vadd.f32 0.0, %v1423
  %1425 = vdwg.mxu0
  %v1426 = vadd.f32 %v989, %v1422
  %v1427 = vadd.f32 %v991, %v1424
  %v1428 = vxor.u32 %v1426, 2147483648
  %v1429 = vxor.u32 %v1427, 2147483648
  %v1430 = vmul.f32 %v1428, 1.442695
  %v1431 = vpow.pop %v1430
  %v1432 = vmul.f32 %v1429, 1.442695
  %v1433 = vpow.pop %v1432
  %v1434 = vadd.f32 %v1431, 1.0
  %v1435 = vadd.f32 %v1433, 1.0
  %v1436 = vrcp.pop %v1434
  %v1437 = vmul.f32 %v1434, %v1436
  %v1438 = vsub.f32 1.0, %v1437
  %v1439 = vmul.f32 %v1436, %v1438
  %v1440 = vadd.f32 %v1436, %v1439
  %vm1441 = vweird.f32 %v1434
  %vm1442 = vweird.f32 %v1436
  %vm1443 = vmor %vm1441, %vm1442
  %v1444 = vsel %vm1443, %v1436, %v1440
  %v1445 = vand.u32 2147483647, %v1434
  %vm1446 = vcmp.eq.f32.partialorder %v1445, 8.507059e+37
  %v1447 = vand.u32 %v1434, 2147483648
  %v1448 = vor.u32 1.1754944e-38, %v1447
  %v1449 = vsel %vm1446, %v1448, %v1444
  %v1450 = vmul.f32 1.0, %v1449
  %v1451 = vrcp.pop %v1435
  %v1452 = vmul.f32 %v1435, %v1451
  %v1453 = vsub.f32 1.0, %v1452
  %v1454 = vmul.f32 %v1451, %v1453
  %v1455 = vadd.f32 %v1451, %v1454
  %vm1456 = vweird.f32 %v1435
  %vm1457 = vweird.f32 %v1451
  %vm1458 = vmor %vm1456, %vm1457
  %v1459 = vsel %vm1458, %v1451, %v1455
  %v1460 = vand.u32 2147483647, %v1435
  %vm1461 = vcmp.eq.f32.partialorder %v1460, 8.507059e+37
  %v1462 = vand.u32 %v1435, 2147483648
  %v1463 = vor.u32 1.1754944e-38, %v1462
  %v1464 = vsel %vm1461, %v1463, %v1459
  %v1465 = vmul.f32 1.0, %v1464
  %v1466 = vtanh.pop %v1426
  %v1467 = vtanh.pop %v1427
  %v1468 = vmul.f32 %v1450, %v1391
  %v1469 = vmul.f32 %v1465, %v1392
  %1472 = vrot.lane.b32.xlu0 %v1466, 32
  %v1473 = vpop.permute.xlu0 %1472
  %1474 = vrot.lane.b32.xlu0 %v1467, 32
  %v1475 = vpop.permute.xlu0 %1474
  %v1478 = vmul.f32 %v1450, %v1473
  %v1479 = vmul.f32 %v1465, %v1475
  %1482 = vrot.lane.b32.xlu0 %v1478, 32
  %v1483 = vpop.permute.xlu0 %1482
  %1484 = vrot.lane.b32.xlu0 %v1479, 32
  %v1485 = vpop.permute.xlu0 %1484
  %v1488 = vadd.f32 %v1468, %v1483
  %v1489 = vadd.f32 %v1469, %v1485
  %v1490 = vtanh.pop %v1488
  %v1491 = vtanh.pop %v1489
  %1494 = vrot.lane.b32.xlu0 %v1490, 32
  %v1495 = vpop.permute.xlu0 %1494
  %1496 = vrot.lane.b32.xlu0 %v1491, 32
  %v1497 = vpop.permute.xlu0 %1496
  %v1500 = vmul.f32 %v1450, %v1495
  %v1501 = vmul.f32 %v1465, %v1497
  %v1502 = vpack.c.bf16 %v1501, %v1500
  %1504 = vrot.lane.b32.xlu0 %v1502, 64
  %v1505 = vpop.permute.xlu0 %1504
  %v1507 = vsel %vm159, %v1505, 0
  %1509 = vmatpush.bf16.msra.mxu0 0
  %1510 = vmatpush.bf16.msra.mxu0 0
  %1511 = vmatpush.bf16.msra.mxu0 0
  %1512 = vmatpush.bf16.msra.mxu0 0
  %1513 = vmatpush.bf16.msra.mxu0 0
  %1514 = vmatpush.bf16.msra.mxu0 0
  %1515 = vmatpush.bf16.msra.mxu0 %v1021
  %1516 = vmatpush.bf16.msra.mxu0 %v1020
  %1517 = vmatmul.bf16.gmra.mxu0 %v1507
  %v1518 = vpop.f32.mrf.mxu0
  %v1519 = vadd.f32 0.0, %v1518
  %v1520 = vpop.f32.mrf.mxu0
  %v1521 = vadd.f32 0.0, %v1520
  %1522 = vdwg.mxu0
  %v1523 = vadd.f32 %v994, %v1519
  %v1524 = vadd.f32 %v996, %v1521
  %v1525 = vxor.u32 %v1523, 2147483648
  %v1526 = vxor.u32 %v1524, 2147483648
  %v1527 = vmul.f32 %v1525, 1.442695
  %v1528 = vpow.pop %v1527
  %v1529 = vmul.f32 %v1526, 1.442695
  %v1530 = vpow.pop %v1529
  %v1531 = vadd.f32 %v1528, 1.0
  %v1532 = vadd.f32 %v1530, 1.0
  %v1533 = vrcp.pop %v1531
  %v1534 = vmul.f32 %v1531, %v1533
  %v1535 = vsub.f32 1.0, %v1534
  %v1536 = vmul.f32 %v1533, %v1535
  %v1537 = vadd.f32 %v1533, %v1536
  %vm1538 = vweird.f32 %v1531
  %vm1539 = vweird.f32 %v1533
  %vm1540 = vmor %vm1538, %vm1539
  %v1541 = vsel %vm1540, %v1533, %v1537
  %v1542 = vand.u32 2147483647, %v1531
  %vm1543 = vcmp.eq.f32.partialorder %v1542, 8.507059e+37
  %v1544 = vand.u32 %v1531, 2147483648
  %v1545 = vor.u32 1.1754944e-38, %v1544
  %v1546 = vsel %vm1543, %v1545, %v1541
  %v1547 = vmul.f32 1.0, %v1546
  %v1548 = vrcp.pop %v1532
  %v1549 = vmul.f32 %v1532, %v1548
  %v1550 = vsub.f32 1.0, %v1549
  %v1551 = vmul.f32 %v1548, %v1550
  %v1552 = vadd.f32 %v1548, %v1551
  %vm1553 = vweird.f32 %v1532
  %vm1554 = vweird.f32 %v1548
  %vm1555 = vmor %vm1553, %vm1554
  %v1556 = vsel %vm1555, %v1548, %v1552
  %v1557 = vand.u32 2147483647, %v1532
  %vm1558 = vcmp.eq.f32.partialorder %v1557, 8.507059e+37
  %v1559 = vand.u32 %v1532, 2147483648
  %v1560 = vor.u32 1.1754944e-38, %v1559
  %v1561 = vsel %vm1558, %v1560, %v1556
  %v1562 = vmul.f32 1.0, %v1561
  %v1563 = vtanh.pop %v1523
  %v1564 = vtanh.pop %v1524
  %v1565 = vmul.f32 %v1547, %v1488
  %v1566 = vmul.f32 %v1562, %v1489
  %1569 = vrot.lane.b32.xlu0 %v1563, 32
  %v1570 = vpop.permute.xlu0 %1569
  %1571 = vrot.lane.b32.xlu0 %v1564, 32
  %v1572 = vpop.permute.xlu0 %1571
  %v1575 = vmul.f32 %v1547, %v1570
  %v1576 = vmul.f32 %v1562, %v1572
  %1579 = vrot.lane.b32.xlu0 %v1575, 32
  %v1580 = vpop.permute.xlu0 %1579
  %1581 = vrot.lane.b32.xlu0 %v1576, 32
  %v1582 = vpop.permute.xlu0 %1581
  %v1585 = vadd.f32 %v1565, %v1580
  %v1586 = vadd.f32 %v1566, %v1582
  %v1587 = vtanh.pop %v1585
  %v1588 = vtanh.pop %v1586
  %1591 = vrot.lane.b32.xlu0 %v1587, 32
  %v1592 = vpop.permute.xlu0 %1591
  %1593 = vrot.lane.b32.xlu0 %v1588, 32
  %v1594 = vpop.permute.xlu0 %1593
  %v1597 = vmul.f32 %v1547, %v1592
  %v1598 = vmul.f32 %v1562, %v1594
  %v1599 = vpack.c.bf16 %v1598, %v1597
  %1601 = vrot.lane.b32.xlu0 %v1599, 64
  %v1602 = vpop.permute.xlu0 %1601
  %v1604 = vsel %vm159, %v1602, 0
  %1606 = vmatpush.bf16.msra.mxu0 0
  %1607 = vmatpush.bf16.msra.mxu0 0
  %1608 = vmatpush.bf16.msra.mxu0 0
  %1609 = vmatpush.bf16.msra.mxu0 0
  %1610 = vmatpush.bf16.msra.mxu0 0
  %1611 = vmatpush.bf16.msra.mxu0 0
  %1612 = vmatpush.bf16.msra.mxu0 %v1021
  %1613 = vmatpush.bf16.msra.mxu0 %v1020
  %1614 = vmatmul.bf16.gmra.mxu0 %v1604
  %v1615 = vpop.f32.mrf.mxu0
  %v1616 = vadd.f32 0.0, %v1615
  %v1617 = vpop.f32.mrf.mxu0
  %v1618 = vadd.f32 0.0, %v1617
  %1619 = vdwg.mxu0
  %v1620 = vadd.f32 %v999, %v1616
  %v1621 = vadd.f32 %v1001, %v1618
  %v1622 = vxor.u32 %v1620, 2147483648
  %v1623 = vxor.u32 %v1621, 2147483648
  %v1624 = vmul.f32 %v1622, 1.442695
  %v1625 = vpow.pop %v1624
  %v1626 = vmul.f32 %v1623, 1.442695
  %v1627 = vpow.pop %v1626
  %v1628 = vadd.f32 %v1625, 1.0
  %v1629 = vadd.f32 %v1627, 1.0
  %v1630 = vrcp.pop %v1628
  %v1631 = vmul.f32 %v1628, %v1630
  %v1632 = vsub.f32 1.0, %v1631
  %v1633 = vmul.f32 %v1630, %v1632
  %v1634 = vadd.f32 %v1630, %v1633
  %vm1635 = vweird.f32 %v1628
  %vm1636 = vweird.f32 %v1630
  %vm1637 = vmor %vm1635, %vm1636
  %v1638 = vsel %vm1637, %v1630, %v1634
  %v1639 = vand.u32 2147483647, %v1628
  %vm1640 = vcmp.eq.f32.partialorder %v1639, 8.507059e+37
  %v1641 = vand.u32 %v1628, 2147483648
  %v1642 = vor.u32 1.1754944e-38, %v1641
  %v1643 = vsel %vm1640, %v1642, %v1638
  %v1644 = vmul.f32 1.0, %v1643
  %v1645 = vrcp.pop %v1629
  %v1646 = vmul.f32 %v1629, %v1645
  %v1647 = vsub.f32 1.0, %v1646
  %v1648 = vmul.f32 %v1645, %v1647
  %v1649 = vadd.f32 %v1645, %v1648
  %vm1650 = vweird.f32 %v1629
  %vm1651 = vweird.f32 %v1645
  %vm1652 = vmor %vm1650, %vm1651
  %v1653 = vsel %vm1652, %v1645, %v1649
  %v1654 = vand.u32 2147483647, %v1629
  %vm1655 = vcmp.eq.f32.partialorder %v1654, 8.507059e+37
  %v1656 = vand.u32 %v1629, 2147483648
  %v1657 = vor.u32 1.1754944e-38, %v1656
  %v1658 = vsel %vm1655, %v1657, %v1653
  %v1659 = vmul.f32 1.0, %v1658
  %v1660 = vtanh.pop %v1620
  %v1661 = vtanh.pop %v1621
  %v1662 = vmul.f32 %v1644, %v1585
  %v1663 = vmul.f32 %v1659, %v1586
  %1666 = vrot.lane.b32.xlu0 %v1660, 32
  %v1667 = vpop.permute.xlu0 %1666
  %1668 = vrot.lane.b32.xlu0 %v1661, 32
  %v1669 = vpop.permute.xlu0 %1668
  %v1672 = vmul.f32 %v1644, %v1667
  %v1673 = vmul.f32 %v1659, %v1669
  %1676 = vrot.lane.b32.xlu0 %v1672, 32
  %v1677 = vpop.permute.xlu0 %1676
  %1678 = vrot.lane.b32.xlu0 %v1673, 32
  %v1679 = vpop.permute.xlu0 %1678
  %v1682 = vadd.f32 %v1662, %v1677
  %v1683 = vadd.f32 %v1663, %v1679
  %v1684 = vtanh.pop %v1682
  %v1685 = vtanh.pop %v1683
  %1688 = vrot.lane.b32.xlu0 %v1684, 32
  %v1689 = vpop.permute.xlu0 %1688
  %1690 = vrot.lane.b32.xlu0 %v1685, 32
  %v1691 = vpop.permute.xlu0 %1690
  %v1694 = vmul.f32 %v1644, %v1689
  %v1695 = vmul.f32 %v1659, %v1691
  %v1696 = vpack.c.bf16 %v1695, %v1694
  %1698 = vrot.lane.b32.xlu0 %v1696, 64
  %v1699 = vpop.permute.xlu0 %1698
  %v1701 = vsel %vm159, %v1699, 0
  %1703 = vmatpush.bf16.msra.mxu0 0
  %1704 = vmatpush.bf16.msra.mxu0 0
  %1705 = vmatpush.bf16.msra.mxu0 0
  %1706 = vmatpush.bf16.msra.mxu0 0
  %1707 = vmatpush.bf16.msra.mxu0 0
  %1708 = vmatpush.bf16.msra.mxu0 0
  %1709 = vmatpush.bf16.msra.mxu0 %v1021
  %1710 = vmatpush.bf16.msra.mxu0 %v1020
  %1711 = vmatmul.bf16.gmra.mxu0 %v1701
  %v1712 = vpop.f32.mrf.mxu0
  %v1713 = vadd.f32 0.0, %v1712
  %v1714 = vpop.f32.mrf.mxu0
  %v1715 = vadd.f32 0.0, %v1714
  %1716 = vdwg.mxu0
  %v1717 = vadd.f32 %v1004, %v1713
  %v1718 = vadd.f32 %v1006, %v1715
  %v1719 = vxor.u32 %v1717, 2147483648
  %v1720 = vxor.u32 %v1718, 2147483648
  %v1721 = vmul.f32 %v1719, 1.442695
  %v1722 = vpow.pop %v1721
  %v1723 = vmul.f32 %v1720, 1.442695
  %v1724 = vpow.pop %v1723
  %v1725 = vadd.f32 %v1722, 1.0
  %v1726 = vadd.f32 %v1724, 1.0
  %v1727 = vrcp.pop %v1725
  %v1728 = vmul.f32 %v1725, %v1727
  %v1729 = vsub.f32 1.0, %v1728
  %v1730 = vmul.f32 %v1727, %v1729
  %v1731 = vadd.f32 %v1727, %v1730
  %vm1732 = vweird.f32 %v1725
  %vm1733 = vweird.f32 %v1727
  %vm1734 = vmor %vm1732, %vm1733
  %v1735 = vsel %vm1734, %v1727, %v1731
  %v1736 = vand.u32 2147483647, %v1725
  %vm1737 = vcmp.eq.f32.partialorder %v1736, 8.507059e+37
  %v1738 = vand.u32 %v1725, 2147483648
  %v1739 = vor.u32 1.1754944e-38, %v1738
  %v1740 = vsel %vm1737, %v1739, %v1735
  %v1741 = vmul.f32 1.0, %v1740
  %v1742 = vrcp.pop %v1726
  %v1743 = vmul.f32 %v1726, %v1742
  %v1744 = vsub.f32 1.0, %v1743
  %v1745 = vmul.f32 %v1742, %v1744
  %v1746 = vadd.f32 %v1742, %v1745
  %vm1747 = vweird.f32 %v1726
  %vm1748 = vweird.f32 %v1742
  %vm1749 = vmor %vm1747, %vm1748
  %v1750 = vsel %vm1749, %v1742, %v1746
  %v1751 = vand.u32 2147483647, %v1726
  %vm1752 = vcmp.eq.f32.partialorder %v1751, 8.507059e+37
  %v1753 = vand.u32 %v1726, 2147483648
  %v1754 = vor.u32 1.1754944e-38, %v1753
  %v1755 = vsel %vm1752, %v1754, %v1750
  %v1756 = vmul.f32 1.0, %v1755
  %v1757 = vtanh.pop %v1717
  %v1758 = vtanh.pop %v1718
  %v1759 = vmul.f32 %v1741, %v1682
  %v1760 = vmul.f32 %v1756, %v1683
  %1763 = vrot.lane.b32.xlu0 %v1757, 32
  %v1764 = vpop.permute.xlu0 %1763
  %1765 = vrot.lane.b32.xlu0 %v1758, 32
  %v1766 = vpop.permute.xlu0 %1765
  %v1769 = vmul.f32 %v1741, %v1764
  %v1770 = vmul.f32 %v1756, %v1766
  %1773 = vrot.lane.b32.xlu0 %v1769, 32
  %v1774 = vpop.permute.xlu0 %1773
  %1775 = vrot.lane.b32.xlu0 %v1770, 32
  %v1776 = vpop.permute.xlu0 %1775
  %v1779 = vadd.f32 %v1759, %v1774
  %v1780 = vadd.f32 %v1760, %v1776
  %v1781 = vtanh.pop %v1779
  %v1782 = vtanh.pop %v1780
  %1785 = vrot.lane.b32.xlu0 %v1781, 32
  %v1786 = vpop.permute.xlu0 %1785
  %1787 = vrot.lane.b32.xlu0 %v1782, 32
  %v1788 = vpop.permute.xlu0 %1787
  %v1791 = vmul.f32 %v1741, %v1786
  %v1792 = vmul.f32 %v1756, %v1788
  %v1793 = vpack.c.bf16 %v1792, %v1791
  %v1794 = vld [vmem:[%s7] sm:$0xf]
  %v1795 = vld [vmem:[%s7 + $0x4] sm:$0xf]
  %v1796 = vld [vmem:[%s7 + $0x8] sm:$0xf]
  %v1797 = vld [vmem:[%s7 + $0xc] sm:$0xf]
  %v1798 = vld [vmem:[%s8] sm:$0x1]
  %v1800 = vperm.slane %v1798, 0
  %1803 = vrot.lane.b32.xlu0 %v1793, 64
  %v1804 = vpop.permute.xlu0 %1803
  %v1809 = vunpack.c.l.b16 %v1794
  %v1810 = vunpack.c.l.b16 %v1795
  %v1811 = vunpack.c.l.b16 %v1796
  %v1812 = vunpack.c.l.b16 %v1797
  %v1813 = vpack.c.b16 %v1810, %v1809
  %v1814 = vpack.c.b16 %v1812, %v1811
  %v1818 = vsel %vm159, %v1804, 0
  %1820 = vmatpush.bf16.msra.mxu0 0
  %1821 = vmatpush.bf16.msra.mxu0 0
  %1822 = vmatpush.bf16.msra.mxu0 0
  %1823 = vmatpush.bf16.msra.mxu0 0
  %1824 = vmatpush.bf16.msra.mxu0 0
  %1825 = vmatpush.bf16.msra.mxu0 0
  %1826 = vmatpush.bf16.msra.mxu0 %v1814
  %1827 = vmatpush.bf16.msra.mxu0 %v1813
  %1828 = vmatmul.bf16.gmra.mxu0 %v1818
  %v1829 = vpop.f32.mrf.mxu0
  %v1830 = vadd.f32 %v1800, %v1829
  %v1831 = vpop.f32.mrf.mxu0
  %v1832 = vadd.f32 %v1800, %v1831
  %1833 = vdwg.mxu0
  %vm1834 = vcmask 31744
  %1835 = vst.msk [vmem:[%s9] sm:$0xff] %vm1834, %v1830
  %1836 = vst.msk [vmem:[%s9 + $0x8] sm:$0xff] %vm1834, %v1832
  // Predicated region
  $region38: #{lstm_model_forward.1} parent=0 // pred_check
    _
  $region39: #{lstm_model_forward.1} parent=0 // pred_check_branch
    %1838 = sbr.rel (0) target = $region41
  $region40: #{lstm_model_forward.1} parent=0 // pred_region
    _
  $region41: #{lstm_model_forward.1} parent=0 // pred_fallthru
    _
  // Predicated region
  $region42: #{lstm_model_forward.1} parent=0 // pred_check
    _
  $region43: #{lstm_model_forward.1} parent=0 // pred_check_branch
    %1840 = sbr.rel (0) target = $region45
  $region44: #{lstm_model_forward.1} parent=0 // pred_region
    _
  $region45: #{lstm_model_forward.1} parent=0 // pred_fallthru
    _

</llo_original>
